<compile_context>
chip_gen: v7x
topology: tpu7x:2x2x1
jax: 0.10.0
libtpu: 0.0.40
codegen_flags: <defaults>
</compile_context>

<pallas_src>
import math

import jax
import jax.numpy as jnp
import numpy as np
from jax.experimental import pallas as pl
from jax.experimental.pallas import tpu as pltpu

GRID_SIZE = 5      # G
SPLINE_ORDER = 3   # K
N_COEF = GRID_SIZE + SPLINE_ORDER            # per-feature spline coefficients (G+K) = 8
N_GRID_PTS = GRID_SIZE + 2 * SPLINE_ORDER + 1  # 12 knots
GRID_RANGE = (-1.0, 1.0)
GRID_H = (GRID_RANGE[1] - GRID_RANGE[0]) / GRID_SIZE


def _uniform_knots(grid_range=GRID_RANGE):
    """Uniform knot vector (same for every feature), as Python float constants."""
    h = (grid_range[1] - grid_range[0]) / GRID_SIZE
    idx = np.arange(-SPLINE_ORDER, GRID_SIZE + SPLINE_ORDER + 1, dtype=np.float32)
    knots_f32 = idx * np.float32(h) + np.float32(grid_range[0])
    return tuple(float(v) for v in knots_f32)


# ---------------------------------------------------------------------------
# Fused Pallas kernel: all KANLinear layers in one pass
# ---------------------------------------------------------------------------
def make_kan_kernel(n_layers, knots, mxu_dtype):
    """knots: tuple of compile-time float constants (uniform, shared by all features)."""

    def kernel(x_ref, *refs):
        out_ref = refs[-1]
        wrefs = refs[:-1]
        x = x_ref[...]                                    # (TB, IN0) f32
        for li in range(n_layers):
            rhs_ref, bn_scale_ref, bn_bias_ref = wrefs[3 * li: 3 * li + 3]

            # --- order-0 B-spline indicators ------------------------------------
            # bases_j = [knots[j] <= x < knots[j+1]] == ge_j - ge_{j+1}
            # (knots increasing => ge_{j+1} implies ge_j, so the difference is 0/1).
            ge = [(x >= knots[j]).astype(jnp.float32) for j in range(N_GRID_PTS)]
            bases = [ge[j] - ge[j + 1] for j in range(N_GRID_PTS - 1)]

            # --- Cox-de Boor recursion on the uniform grid ------------------------
            # At level k every denominator equals k*h; with w_i = (x - knots[i])/(k*h)
            #   bases_new[j] = w_j * bases[j] + (1 - w_{j+1}) * bases[j+1]
            for k in range(1, SPLINE_ORDER + 1):
                inv_kh = 1.0 / (k * GRID_H)
                s = x * inv_kh
                n_in = len(bases)
                w = [s - (knots[i] * inv_kh) for i in range(n_in)]
                v = [None] + [1.0 - w[i] for i in range(1, n_in)]
                bases = [w[j] * bases[j] + v[j + 1] * bases[j + 1]
                         for j in range(n_in - 1)]
            # bases: N_COEF tiles of shape (TB, IN)

            # --- single fused matmul: [SiLU(x) | bases] @ [base_wT ; spline_w] ----
            silu_x = x * pl.reciprocal(1.0 + jnp.exp(-x), approx=False)
            lhs = jnp.concatenate([silu_x] + bases, axis=1)   # (TB, (NC+1)*IN)
            acc = jnp.dot(lhs.astype(mxu_dtype), rhs_ref[...],
                          preferred_element_type=jnp.float32)  # (TB, OUT)

            # --- BatchNorm1d (eval) folded into a per-feature affine ---------------
            x = acc * bn_scale_ref[...] + bn_bias_ref[...]

            # TODO(synk): nn.Dropout(p=0.5) between layers is stochastic in training
            # mode; eval-mode dropout is identity, so nothing to do here.
        out_ref[...] = x.astype(out_ref.dtype)

    return kernel


def kan_forward(x, prepared, *, knots, mxu_dtype=jnp.float32, tb=None):
    """Fused forward pass over all KANLinear layers in a single pallas_call."""
    B, IN0 = x.shape
    layer_dims = [(p["rhs"].shape[0] // (N_COEF + 1), p["rhs"].shape[1])
                  for p in prepared]
    assert IN0 == layer_dims[0][0]
    OUT_LAST = layer_dims[-1][1]

    if tb is None:
        # Cap at 128 (vreg pressure from the unrolled recursion) and prefer >= 2 grid
        # steps so both v7x TensorCores get work via dimension_semantics=("parallel",).
        tb = B
        if B >= 16:
            for cand in (128, 64, 32, 16, 8):
                if cand <= B // 2 and B % cand == 0:
                    tb = cand
                    break
    assert B % tb == 0

    kernel = make_kan_kernel(len(layer_dims), knots, mxu_dtype)

    in_specs = [pl.BlockSpec((tb, IN0), lambda i: (i, 0))]      # x: batch-tiled
    args = [x.astype(jnp.float32)]
    for p, (fin, fout) in zip(prepared, layer_dims):
        in_specs += [
            pl.BlockSpec(((N_COEF + 1) * fin, fout), lambda i: (0, 0)),  # packed RHS
            pl.BlockSpec((1, fout), lambda i: (0, 0)),                   # folded BN scale
            pl.BlockSpec((1, fout), lambda i: (0, 0)),                   # folded BN bias
        ]
        args += [p["rhs"], p["bn_scale"], p["bn_bias"]]

    return pl.pallas_call(
        kernel,
        out_shape=jax.ShapeDtypeStruct((B, OUT_LAST), jnp.float32),
        grid_spec=pltpu.PrefetchScalarGridSpec(
            num_scalar_prefetch=0,
            grid=(B // tb,),
            in_specs=in_specs,
            out_specs=pl.BlockSpec((tb, OUT_LAST), lambda i: (i, 0)),
        ),
        compiler_params=pltpu.CompilerParams(
            dimension_semantics=("parallel",)),
    )(*args)


# ---------------------------------------------------------------------------
# Parameter construction + one-time kernel-ready preparation
# ---------------------------------------------------------------------------
def init_kan_params(key, layers_hidden, grid_range=GRID_RANGE):
    params = []
    h = (grid_range[1] - grid_range[0]) / GRID_SIZE
    knots = (jnp.arange(-SPLINE_ORDER, GRID_SIZE + SPLINE_ORDER + 1,
                        dtype=jnp.float32) * h + grid_range[0])       # (G+2K+1,)
    for fin, fout in zip(layers_hidden, layers_hidden[1:]):
        key, k1, k2, k3 = jax.random.split(key, 4)
        bound = 1.0 / math.sqrt(fin)
        params.append(dict(
            grid=jnp.broadcast_to(knots, (fin, N_GRID_PTS)).astype(jnp.float32),
            base_weight=jax.random.uniform(k1, (fout, fin), jnp.float32, -bound, bound),
            spline_weight=jax.random.uniform(k2, (fout, fin, N_COEF), jnp.float32, -0.1, 0.1),
            spline_scaler=jax.random.uniform(k3, (fout, fin), jnp.float32, -bound, bound),
            # BatchNorm1d defaults (eval mode): gamma=1, beta=0, running stats 0/1.
            bn_gamma=jnp.ones((fout,), jnp.float32),
            bn_beta=jnp.zeros((fout,), jnp.float32),
            bn_mean=jnp.zeros((fout,), jnp.float32),
            bn_var=jnp.ones((fout,), jnp.float32),
        ))
    return params


def prepare_kan_params(params, mxu_dtype=jnp.float32):
    """Fold/transpose/pack weights once (inference-static): outside the hot path.

    Packs, per layer, a single RHS of shape ((NC+1)*IN, OUT):
      rows [0:IN]              = base_weight.T
      rows [(1+c)*IN:(2+c)*IN] = (spline_weight * spline_scaler)[..., c].T
    matching the in-kernel LHS lane order [SiLU(x) | bases_0 .. bases_{NC-1}].
    """
    prepared = []
    eps = 1e-5
    for p in params:
        fout, fin = p["base_weight"].shape
        base_wT = p["base_weight"].T                                    # (IN, OUT)
        ssw = p["spline_weight"] * p["spline_scaler"][:, :, None]       # (OUT, IN, NC)
        spline_chunks = jnp.transpose(ssw, (2, 1, 0))                   # (NC, IN, OUT)
        rhs = jnp.concatenate([base_wT[None], spline_chunks], axis=0)   # (NC+1, IN, OUT)
        rhs = rhs.reshape((N_COEF + 1) * fin, fout).astype(mxu_dtype)
        scale = p["bn_gamma"] * jax.lax.rsqrt(p["bn_var"] + eps)
        bias = p["bn_beta"] - p["bn_mean"] * scale
        prepared.append(dict(
            rhs=rhs,
            bn_scale=scale.reshape(1, fout).astype(jnp.float32),
            bn_bias=bias.reshape(1, fout).astype(jnp.float32),
        ))
    return prepared


# ---------------------------------------------------------------------------
# Pure-JAX reference (same math, no Pallas) for correctness checks
# ---------------------------------------------------------------------------
def _b_splines_ref(x, grid):
    xe = x[:, :, None]
    bases = ((xe >= grid[None, :, :-1]) & (xe < grid[None, :, 1:])).astype(x.dtype)
    for k in range(1, SPLINE_ORDER + 1):
        bases = ((xe - grid[None, :, : -(k + 1)])
                 / (grid[None, :, k:-1] - grid[None, :, : -(k + 1)]) * bases[:, :, :-1]
                 + (grid[None, :, k + 1:] - xe)
                 / (grid[None, :, k + 1:] - grid[None, :, 1:-k]) * bases[:, :, 1:])
    return bases


def kan_forward_ref(x, params):
    hi = jax.lax.Precision.HIGHEST
    for p in params:
        B, _ = x.shape
        OUT = p["base_weight"].shape[0]
        ssw = p["spline_weight"] * p["spline_scaler"][:, :, None]
        spline = jnp.dot(_b_splines_ref(x, p["grid"]).reshape(B, -1),
                         ssw.reshape(OUT, -1).T, precision=hi)
        base = jnp.dot(x * jax.nn.sigmoid(x), p["base_weight"].T, precision=hi)
        out = base + spline
        scale = p["bn_gamma"] / jnp.sqrt(p["bn_var"] + 1e-5)
        x = out * scale + (p["bn_beta"] - p["bn_mean"] * scale)
    return x


if __name__ == "__main__":
    key = jax.random.PRNGKey(0)
    layers_hidden = [32, 64, 16]          # KAN([32, 64, 16])
    kp, kx = jax.random.split(key)
    params = init_kan_params(kp, layers_hidden)
    knots = _uniform_knots()

    B = 16
    x = jax.random.uniform(kx, (B, layers_hidden[0]), jnp.float32, -0.9, 0.9)

    y_ref = jax.block_until_ready(kan_forward_ref(x, params))

    # f32 MXU path (use this on v5e): tight check of the fused-matmul / recursion rewrite.
    prep_f32 = prepare_kan_params(params, jnp.float32)
    y32 = jax.block_until_ready(
        kan_forward(x, prep_f32, knots=knots, mxu_dtype=jnp.float32))
    assert y32.shape == (B, layers_hidden[-1])
    np.testing.assert_allclose(np.asarray(y32), np.asarray(y_ref), rtol=2e-3, atol=2e-3)

    # bf16 MXU-operand path (v6e/v7x performance config), f32 accumulation,
    # single LHS cast per layer.
    prep_bf16 = prepare_kan_params(params, jnp.bfloat16)
    ybf = jax.block_until_ready(
        kan_forward(x, prep_bf16, knots=knots, mxu_dtype=jnp.bfloat16))
    np.testing.assert_allclose(np.asarray(ybf), np.asarray(y_ref), rtol=6e-2, atol=6e-2)

    print("KERNEL_OK")
</pallas_src>

<mosaic_0001>
module attributes {stable_mosaic.version = 11 : i64} {
  func.func @kernel(%arg0: i32, %arg1: memref<8x32xf32, #tpu.memory_space<vmem>>, %arg2: memref<288x64xf32, #tpu.memory_space<vmem>>, %arg3: memref<1x64xf32, #tpu.memory_space<vmem>>, %arg4: memref<1x64xf32, #tpu.memory_space<vmem>>, %arg5: memref<576x16xf32, #tpu.memory_space<vmem>>, %arg6: memref<1x16xf32, #tpu.memory_space<vmem>>, %arg7: memref<1x16xf32, #tpu.memory_space<vmem>>, %arg8: memref<8x16xf32, #tpu.memory_space<vmem>>) attributes {dimension_semantics = [#tpu.dimension_semantics<parallel>], iteration_bounds = array<i64: 2>, scalar_prefetch = 0 : i64, scratch_operands = 0 : i64, tpu.core_type = #tpu.core_type<tc>, window_params = [{transform_indices = @transform_0, window_bounds = array<i64: 8, 32>}, {pipeline_mode = #tpu.pipeline_mode<synchronous>, transform_indices = @transform_1, window_bounds = array<i64: 288, 64>}, {pipeline_mode = #tpu.pipeline_mode<synchronous>, transform_indices = @transform_2, window_bounds = array<i64: 1, 64>}, {pipeline_mode = #tpu.pipeline_mode<synchronous>, transform_indices = @transform_3, window_bounds = array<i64: 1, 64>}, {pipeline_mode = #tpu.pipeline_mode<synchronous>, transform_indices = @transform_4, window_bounds = array<i64: 576, 16>}, {pipeline_mode = #tpu.pipeline_mode<synchronous>, transform_indices = @transform_5, window_bounds = array<i64: 1, 16>}, {pipeline_mode = #tpu.pipeline_mode<synchronous>, transform_indices = @transform_6, window_bounds = array<i64: 1, 16>}, {transform_indices = @transform_7, window_bounds = array<i64: 8, 16>}]} {
    %c0 = arith.constant 0 : index
    %c0_0 = arith.constant 0 : index
    %0 = vector.load %arg1[%c0, %c0_0] : memref<8x32xf32, #tpu.memory_space<vmem>>, vector<8x32xf32>
    %cst = arith.constant -2.200000e+00 : f32
    %1 = vector.broadcast %cst : f32 to vector<8x32xf32>
    %2 = arith.cmpf oge, %0, %1 : vector<8x32xf32>
    %3 = arith.extui %2 : vector<8x32xi1> to vector<8x32xi32>
    %4 = arith.sitofp %3 : vector<8x32xi32> to vector<8x32xf32>
    %cst_1 = arith.constant -1.800000e+00 : f32
    %5 = vector.broadcast %cst_1 : f32 to vector<8x32xf32>
    %6 = arith.cmpf oge, %0, %5 : vector<8x32xf32>
    %7 = arith.extui %6 : vector<8x32xi1> to vector<8x32xi32>
    %8 = arith.sitofp %7 : vector<8x32xi32> to vector<8x32xf32>
    %cst_2 = arith.constant -1.400000e+00 : f32
    %9 = vector.broadcast %cst_2 : f32 to vector<8x32xf32>
    %10 = arith.cmpf oge, %0, %9 : vector<8x32xf32>
    %11 = arith.extui %10 : vector<8x32xi1> to vector<8x32xi32>
    %12 = arith.sitofp %11 : vector<8x32xi32> to vector<8x32xf32>
    %cst_3 = arith.constant -1.000000e+00 : f32
    %13 = vector.broadcast %cst_3 : f32 to vector<8x32xf32>
    %14 = arith.cmpf oge, %0, %13 : vector<8x32xf32>
    %15 = arith.extui %14 : vector<8x32xi1> to vector<8x32xi32>
    %16 = arith.sitofp %15 : vector<8x32xi32> to vector<8x32xf32>
    %cst_4 = arith.constant -6.000000e-01 : f32
    %17 = vector.broadcast %cst_4 : f32 to vector<8x32xf32>
    %18 = arith.cmpf oge, %0, %17 : vector<8x32xf32>
    %19 = arith.extui %18 : vector<8x32xi1> to vector<8x32xi32>
    %20 = arith.sitofp %19 : vector<8x32xi32> to vector<8x32xf32>
    %cst_5 = arith.constant -0.199999988 : f32
    %21 = vector.broadcast %cst_5 : f32 to vector<8x32xf32>
    %22 = arith.cmpf oge, %0, %21 : vector<8x32xf32>
    %23 = arith.extui %22 : vector<8x32xi1> to vector<8x32xi32>
    %24 = arith.sitofp %23 : vector<8x32xi32> to vector<8x32xf32>
    %cst_6 = arith.constant 0.200000048 : f32
    %25 = vector.broadcast %cst_6 : f32 to vector<8x32xf32>
    %26 = arith.cmpf oge, %0, %25 : vector<8x32xf32>
    %27 = arith.extui %26 : vector<8x32xi1> to vector<8x32xi32>
    %28 = arith.sitofp %27 : vector<8x32xi32> to vector<8x32xf32>
    %cst_7 = arith.constant 6.000000e-01 : f32
    %29 = vector.broadcast %cst_7 : f32 to vector<8x32xf32>
    %30 = arith.cmpf oge, %0, %29 : vector<8x32xf32>
    %31 = arith.extui %30 : vector<8x32xi1> to vector<8x32xi32>
    %32 = arith.sitofp %31 : vector<8x32xi32> to vector<8x32xf32>
    %cst_8 = arith.constant 1.000000e+00 : f32
    %33 = vector.broadcast %cst_8 : f32 to vector<8x32xf32>
    %34 = arith.cmpf oge, %0, %33 : vector<8x32xf32>
    %35 = arith.extui %34 : vector<8x32xi1> to vector<8x32xi32>
    %36 = arith.sitofp %35 : vector<8x32xi32> to vector<8x32xf32>
    %cst_9 = arith.constant 1.4000001 : f32
    %37 = vector.broadcast %cst_9 : f32 to vector<8x32xf32>
    %38 = arith.cmpf oge, %0, %37 : vector<8x32xf32>
    %39 = arith.extui %38 : vector<8x32xi1> to vector<8x32xi32>
    %40 = arith.sitofp %39 : vector<8x32xi32> to vector<8x32xf32>
    %cst_10 = arith.constant 1.800000e+00 : f32
    %41 = vector.broadcast %cst_10 : f32 to vector<8x32xf32>
    %42 = arith.cmpf oge, %0, %41 : vector<8x32xf32>
    %43 = arith.extui %42 : vector<8x32xi1> to vector<8x32xi32>
    %44 = arith.sitofp %43 : vector<8x32xi32> to vector<8x32xf32>
    %cst_11 = arith.constant 2.200000e+00 : f32
    %45 = vector.broadcast %cst_11 : f32 to vector<8x32xf32>
    %46 = arith.cmpf oge, %0, %45 : vector<8x32xf32>
    %47 = arith.extui %46 : vector<8x32xi1> to vector<8x32xi32>
    %48 = arith.sitofp %47 : vector<8x32xi32> to vector<8x32xf32>
    %49 = arith.subf %4, %8 : vector<8x32xf32>
    %50 = arith.subf %8, %12 : vector<8x32xf32>
    %51 = arith.subf %12, %16 : vector<8x32xf32>
    %52 = arith.subf %16, %20 : vector<8x32xf32>
    %53 = arith.subf %20, %24 : vector<8x32xf32>
    %54 = arith.subf %24, %28 : vector<8x32xf32>
    %55 = arith.subf %28, %32 : vector<8x32xf32>
    %56 = arith.subf %32, %36 : vector<8x32xf32>
    %57 = arith.subf %36, %40 : vector<8x32xf32>
    %58 = arith.subf %40, %44 : vector<8x32xf32>
    %59 = arith.subf %44, %48 : vector<8x32xf32>
    %cst_12 = arith.constant 2.500000e+00 : f32
    %60 = vector.broadcast %cst_12 : f32 to vector<8x32xf32>
    %61 = arith.mulf %0, %60 : vector<8x32xf32>
    %cst_13 = arith.constant -5.500000e+00 : f32
    %62 = vector.broadcast %cst_13 : f32 to vector<8x32xf32>
    %63 = arith.subf %61, %62 : vector<8x32xf32>
    %cst_14 = arith.constant -4.500000e+00 : f32
    %64 = vector.broadcast %cst_14 : f32 to vector<8x32xf32>
    %65 = arith.subf %61, %64 : vector<8x32xf32>
    %cst_15 = arith.constant -3.500000e+00 : f32
    %66 = vector.broadcast %cst_15 : f32 to vector<8x32xf32>
    %67 = arith.subf %61, %66 : vector<8x32xf32>
    %cst_16 = arith.constant -2.500000e+00 : f32
    %68 = vector.broadcast %cst_16 : f32 to vector<8x32xf32>
    %69 = arith.subf %61, %68 : vector<8x32xf32>
    %cst_17 = arith.constant -1.500000e+00 : f32
    %70 = vector.broadcast %cst_17 : f32 to vector<8x32xf32>
    %71 = arith.subf %61, %70 : vector<8x32xf32>
    %cst_18 = arith.constant -0.49999997 : f32
    %72 = vector.broadcast %cst_18 : f32 to vector<8x32xf32>
    %73 = arith.subf %61, %72 : vector<8x32xf32>
    %cst_19 = arith.constant 0.500000119 : f32
    %74 = vector.broadcast %cst_19 : f32 to vector<8x32xf32>
    %75 = arith.subf %61, %74 : vector<8x32xf32>
    %cst_20 = arith.constant 1.500000e+00 : f32
    %76 = vector.broadcast %cst_20 : f32 to vector<8x32xf32>
    %77 = arith.subf %61, %76 : vector<8x32xf32>
    %cst_21 = arith.constant 2.500000e+00 : f32
    %78 = vector.broadcast %cst_21 : f32 to vector<8x32xf32>
    %79 = arith.subf %61, %78 : vector<8x32xf32>
    %cst_22 = arith.constant 3.50000024 : f32
    %80 = vector.broadcast %cst_22 : f32 to vector<8x32xf32>
    %81 = arith.subf %61, %80 : vector<8x32xf32>
    %cst_23 = arith.constant 4.500000e+00 : f32
    %82 = vector.broadcast %cst_23 : f32 to vector<8x32xf32>
    %83 = arith.subf %61, %82 : vector<8x32xf32>
    %cst_24 = arith.constant 1.000000e+00 : f32
    %84 = vector.broadcast %cst_24 : f32 to vector<8x32xf32>
    %85 = arith.subf %84, %65 : vector<8x32xf32>
    %cst_25 = arith.constant 1.000000e+00 : f32
    %86 = vector.broadcast %cst_25 : f32 to vector<8x32xf32>
    %87 = arith.subf %86, %67 : vector<8x32xf32>
    %cst_26 = arith.constant 1.000000e+00 : f32
    %88 = vector.broadcast %cst_26 : f32 to vector<8x32xf32>
    %89 = arith.subf %88, %69 : vector<8x32xf32>
    %cst_27 = arith.constant 1.000000e+00 : f32
    %90 = vector.broadcast %cst_27 : f32 to vector<8x32xf32>
    %91 = arith.subf %90, %71 : vector<8x32xf32>
    %cst_28 = arith.constant 1.000000e+00 : f32
    %92 = vector.broadcast %cst_28 : f32 to vector<8x32xf32>
    %93 = arith.subf %92, %73 : vector<8x32xf32>
    %cst_29 = arith.constant 1.000000e+00 : f32
    %94 = vector.broadcast %cst_29 : f32 to vector<8x32xf32>
    %95 = arith.subf %94, %75 : vector<8x32xf32>
    %cst_30 = arith.constant 1.000000e+00 : f32
    %96 = vector.broadcast %cst_30 : f32 to vector<8x32xf32>
    %97 = arith.subf %96, %77 : vector<8x32xf32>
    %cst_31 = arith.constant 1.000000e+00 : f32
    %98 = vector.broadcast %cst_31 : f32 to vector<8x32xf32>
    %99 = arith.subf %98, %79 : vector<8x32xf32>
    %cst_32 = arith.constant 1.000000e+00 : f32
    %100 = vector.broadcast %cst_32 : f32 to vector<8x32xf32>
    %101 = arith.subf %100, %81 : vector<8x32xf32>
    %cst_33 = arith.constant 1.000000e+00 : f32
    %102 = vector.broadcast %cst_33 : f32 to vector<8x32xf32>
    %103 = arith.subf %102, %83 : vector<8x32xf32>
    %104 = arith.mulf %63, %49 : vector<8x32xf32>
    %105 = arith.mulf %85, %50 : vector<8x32xf32>
    %106 = arith.addf %104, %105 : vector<8x32xf32>
    %107 = arith.mulf %65, %50 : vector<8x32xf32>
    %108 = arith.mulf %87, %51 : vector<8x32xf32>
    %109 = arith.addf %107, %108 : vector<8x32xf32>
    %110 = arith.mulf %67, %51 : vector<8x32xf32>
    %111 = arith.mulf %89, %52 : vector<8x32xf32>
    %112 = arith.addf %110, %111 : vector<8x32xf32>
    %113 = arith.mulf %69, %52 : vector<8x32xf32>
    %114 = arith.mulf %91, %53 : vector<8x32xf32>
    %115 = arith.addf %113, %114 : vector<8x32xf32>
    %116 = arith.mulf %71, %53 : vector<8x32xf32>
    %117 = arith.mulf %93, %54 : vector<8x32xf32>
    %118 = arith.addf %116, %117 : vector<8x32xf32>
    %119 = arith.mulf %73, %54 : vector<8x32xf32>
    %120 = arith.mulf %95, %55 : vector<8x32xf32>
    %121 = arith.addf %119, %120 : vector<8x32xf32>
    %122 = arith.mulf %75, %55 : vector<8x32xf32>
    %123 = arith.mulf %97, %56 : vector<8x32xf32>
    %124 = arith.addf %122, %123 : vector<8x32xf32>
    %125 = arith.mulf %77, %56 : vector<8x32xf32>
    %126 = arith.mulf %99, %57 : vector<8x32xf32>
    %127 = arith.addf %125, %126 : vector<8x32xf32>
    %128 = arith.mulf %79, %57 : vector<8x32xf32>
    %129 = arith.mulf %101, %58 : vector<8x32xf32>
    %130 = arith.addf %128, %129 : vector<8x32xf32>
    %131 = arith.mulf %81, %58 : vector<8x32xf32>
    %132 = arith.mulf %103, %59 : vector<8x32xf32>
    %133 = arith.addf %131, %132 : vector<8x32xf32>
    %cst_34 = arith.constant 1.250000e+00 : f32
    %134 = vector.broadcast %cst_34 : f32 to vector<8x32xf32>
    %135 = arith.mulf %0, %134 : vector<8x32xf32>
    %cst_35 = arith.constant -2.750000e+00 : f32
    %136 = vector.broadcast %cst_35 : f32 to vector<8x32xf32>
    %137 = arith.subf %135, %136 : vector<8x32xf32>
    %cst_36 = arith.constant -2.250000e+00 : f32
    %138 = vector.broadcast %cst_36 : f32 to vector<8x32xf32>
    %139 = arith.subf %135, %138 : vector<8x32xf32>
    %cst_37 = arith.constant -1.750000e+00 : f32
    %140 = vector.broadcast %cst_37 : f32 to vector<8x32xf32>
    %141 = arith.subf %135, %140 : vector<8x32xf32>
    %cst_38 = arith.constant -1.250000e+00 : f32
    %142 = vector.broadcast %cst_38 : f32 to vector<8x32xf32>
    %143 = arith.subf %135, %142 : vector<8x32xf32>
    %cst_39 = arith.constant -7.500000e-01 : f32
    %144 = vector.broadcast %cst_39 : f32 to vector<8x32xf32>
    %145 = arith.subf %135, %144 : vector<8x32xf32>
    %cst_40 = arith.constant -0.249999985 : f32
    %146 = vector.broadcast %cst_40 : f32 to vector<8x32xf32>
    %147 = arith.subf %135, %146 : vector<8x32xf32>
    %cst_41 = arith.constant 0.25000006 : f32
    %148 = vector.broadcast %cst_41 : f32 to vector<8x32xf32>
    %149 = arith.subf %135, %148 : vector<8x32xf32>
    %cst_42 = arith.constant 7.500000e-01 : f32
    %150 = vector.broadcast %cst_42 : f32 to vector<8x32xf32>
    %151 = arith.subf %135, %150 : vector<8x32xf32>
    %cst_43 = arith.constant 1.250000e+00 : f32
    %152 = vector.broadcast %cst_43 : f32 to vector<8x32xf32>
    %153 = arith.subf %135, %152 : vector<8x32xf32>
    %cst_44 = arith.constant 1.75000012 : f32
    %154 = vector.broadcast %cst_44 : f32 to vector<8x32xf32>
    %155 = arith.subf %135, %154 : vector<8x32xf32>
    %cst_45 = arith.constant 1.000000e+00 : f32
    %156 = vector.broadcast %cst_45 : f32 to vector<8x32xf32>
    %157 = arith.subf %156, %139 : vector<8x32xf32>
    %cst_46 = arith.constant 1.000000e+00 : f32
    %158 = vector.broadcast %cst_46 : f32 to vector<8x32xf32>
    %159 = arith.subf %158, %141 : vector<8x32xf32>
    %cst_47 = arith.constant 1.000000e+00 : f32
    %160 = vector.broadcast %cst_47 : f32 to vector<8x32xf32>
    %161 = arith.subf %160, %143 : vector<8x32xf32>
    %cst_48 = arith.constant 1.000000e+00 : f32
    %162 = vector.broadcast %cst_48 : f32 to vector<8x32xf32>
    %163 = arith.subf %162, %145 : vector<8x32xf32>
    %cst_49 = arith.constant 1.000000e+00 : f32
    %164 = vector.broadcast %cst_49 : f32 to vector<8x32xf32>
    %165 = arith.subf %164, %147 : vector<8x32xf32>
    %cst_50 = arith.constant 1.000000e+00 : f32
    %166 = vector.broadcast %cst_50 : f32 to vector<8x32xf32>
    %167 = arith.subf %166, %149 : vector<8x32xf32>
    %cst_51 = arith.constant 1.000000e+00 : f32
    %168 = vector.broadcast %cst_51 : f32 to vector<8x32xf32>
    %169 = arith.subf %168, %151 : vector<8x32xf32>
    %cst_52 = arith.constant 1.000000e+00 : f32
    %170 = vector.broadcast %cst_52 : f32 to vector<8x32xf32>
    %171 = arith.subf %170, %153 : vector<8x32xf32>
    %cst_53 = arith.constant 1.000000e+00 : f32
    %172 = vector.broadcast %cst_53 : f32 to vector<8x32xf32>
    %173 = arith.subf %172, %155 : vector<8x32xf32>
    %174 = arith.mulf %137, %106 : vector<8x32xf32>
    %175 = arith.mulf %157, %109 : vector<8x32xf32>
    %176 = arith.addf %174, %175 : vector<8x32xf32>
    %177 = arith.mulf %139, %109 : vector<8x32xf32>
    %178 = arith.mulf %159, %112 : vector<8x32xf32>
    %179 = arith.addf %177, %178 : vector<8x32xf32>
    %180 = arith.mulf %141, %112 : vector<8x32xf32>
    %181 = arith.mulf %161, %115 : vector<8x32xf32>
    %182 = arith.addf %180, %181 : vector<8x32xf32>
    %183 = arith.mulf %143, %115 : vector<8x32xf32>
    %184 = arith.mulf %163, %118 : vector<8x32xf32>
    %185 = arith.addf %183, %184 : vector<8x32xf32>
    %186 = arith.mulf %145, %118 : vector<8x32xf32>
    %187 = arith.mulf %165, %121 : vector<8x32xf32>
    %188 = arith.addf %186, %187 : vector<8x32xf32>
    %189 = arith.mulf %147, %121 : vector<8x32xf32>
    %190 = arith.mulf %167, %124 : vector<8x32xf32>
    %191 = arith.addf %189, %190 : vector<8x32xf32>
    %192 = arith.mulf %149, %124 : vector<8x32xf32>
    %193 = arith.mulf %169, %127 : vector<8x32xf32>
    %194 = arith.addf %192, %193 : vector<8x32xf32>
    %195 = arith.mulf %151, %127 : vector<8x32xf32>
    %196 = arith.mulf %171, %130 : vector<8x32xf32>
    %197 = arith.addf %195, %196 : vector<8x32xf32>
    %198 = arith.mulf %153, %130 : vector<8x32xf32>
    %199 = arith.mulf %173, %133 : vector<8x32xf32>
    %200 = arith.addf %198, %199 : vector<8x32xf32>
    %cst_54 = arith.constant 0.833333313 : f32
    %201 = vector.broadcast %cst_54 : f32 to vector<8x32xf32>
    %202 = arith.mulf %0, %201 : vector<8x32xf32>
    %cst_55 = arith.constant -1.83333337 : f32
    %203 = vector.broadcast %cst_55 : f32 to vector<8x32xf32>
    %204 = arith.subf %202, %203 : vector<8x32xf32>
    %cst_56 = arith.constant -1.500000e+00 : f32
    %205 = vector.broadcast %cst_56 : f32 to vector<8x32xf32>
    %206 = arith.subf %202, %205 : vector<8x32xf32>
    %cst_57 = arith.constant -1.16666663 : f32
    %207 = vector.broadcast %cst_57 : f32 to vector<8x32xf32>
    %208 = arith.subf %202, %207 : vector<8x32xf32>
    %cst_58 = arith.constant -0.833333313 : f32
    %209 = vector.broadcast %cst_58 : f32 to vector<8x32xf32>
    %210 = arith.subf %202, %209 : vector<8x32xf32>
    %cst_59 = arith.constant -5.000000e-01 : f32
    %211 = vector.broadcast %cst_59 : f32 to vector<8x32xf32>
    %212 = arith.subf %202, %211 : vector<8x32xf32>
    %cst_60 = arith.constant -0.166666657 : f32
    %213 = vector.broadcast %cst_60 : f32 to vector<8x32xf32>
    %214 = arith.subf %202, %213 : vector<8x32xf32>
    %cst_61 = arith.constant 0.166666701 : f32
    %215 = vector.broadcast %cst_61 : f32 to vector<8x32xf32>
    %216 = arith.subf %202, %215 : vector<8x32xf32>
    %cst_62 = arith.constant 5.000000e-01 : f32
    %217 = vector.broadcast %cst_62 : f32 to vector<8x32xf32>
    %218 = arith.subf %202, %217 : vector<8x32xf32>
    %cst_63 = arith.constant 0.833333313 : f32
    %219 = vector.broadcast %cst_63 : f32 to vector<8x32xf32>
    %220 = arith.subf %202, %219 : vector<8x32xf32>
    %cst_64 = arith.constant 1.000000e+00 : f32
    %221 = vector.broadcast %cst_64 : f32 to vector<8x32xf32>
    %222 = arith.subf %221, %206 : vector<8x32xf32>
    %cst_65 = arith.constant 1.000000e+00 : f32
    %223 = vector.broadcast %cst_65 : f32 to vector<8x32xf32>
    %224 = arith.subf %223, %208 : vector<8x32xf32>
    %cst_66 = arith.constant 1.000000e+00 : f32
    %225 = vector.broadcast %cst_66 : f32 to vector<8x32xf32>
    %226 = arith.subf %225, %210 : vector<8x32xf32>
    %cst_67 = arith.constant 1.000000e+00 : f32
    %227 = vector.broadcast %cst_67 : f32 to vector<8x32xf32>
    %228 = arith.subf %227, %212 : vector<8x32xf32>
    %cst_68 = arith.constant 1.000000e+00 : f32
    %229 = vector.broadcast %cst_68 : f32 to vector<8x32xf32>
    %230 = arith.subf %229, %214 : vector<8x32xf32>
    %cst_69 = arith.constant 1.000000e+00 : f32
    %231 = vector.broadcast %cst_69 : f32 to vector<8x32xf32>
    %232 = arith.subf %231, %216 : vector<8x32xf32>
    %cst_70 = arith.constant 1.000000e+00 : f32
    %233 = vector.broadcast %cst_70 : f32 to vector<8x32xf32>
    %234 = arith.subf %233, %218 : vector<8x32xf32>
    %cst_71 = arith.constant 1.000000e+00 : f32
    %235 = vector.broadcast %cst_71 : f32 to vector<8x32xf32>
    %236 = arith.subf %235, %220 : vector<8x32xf32>
    %237 = arith.mulf %204, %176 : vector<8x32xf32>
    %238 = arith.mulf %222, %179 : vector<8x32xf32>
    %239 = arith.addf %237, %238 : vector<8x32xf32>
    %240 = arith.mulf %206, %179 : vector<8x32xf32>
    %241 = arith.mulf %224, %182 : vector<8x32xf32>
    %242 = arith.addf %240, %241 : vector<8x32xf32>
    %243 = arith.mulf %208, %182 : vector<8x32xf32>
    %244 = arith.mulf %226, %185 : vector<8x32xf32>
    %245 = arith.addf %243, %244 : vector<8x32xf32>
    %246 = arith.mulf %210, %185 : vector<8x32xf32>
    %247 = arith.mulf %228, %188 : vector<8x32xf32>
    %248 = arith.addf %246, %247 : vector<8x32xf32>
    %249 = arith.mulf %212, %188 : vector<8x32xf32>
    %250 = arith.mulf %230, %191 : vector<8x32xf32>
    %251 = arith.addf %249, %250 : vector<8x32xf32>
    %252 = arith.mulf %214, %191 : vector<8x32xf32>
    %253 = arith.mulf %232, %194 : vector<8x32xf32>
    %254 = arith.addf %252, %253 : vector<8x32xf32>
    %255 = arith.mulf %216, %194 : vector<8x32xf32>
    %256 = arith.mulf %234, %197 : vector<8x32xf32>
    %257 = arith.addf %255, %256 : vector<8x32xf32>
    %258 = arith.mulf %218, %197 : vector<8x32xf32>
    %259 = arith.mulf %236, %200 : vector<8x32xf32>
    %260 = arith.addf %258, %259 : vector<8x32xf32>
    %cst_72 = arith.constant 0.000000e+00 : f32
    %261 = vector.broadcast %cst_72 : f32 to vector<8x32xf32>
    %262 = arith.subf %261, %0 : vector<8x32xf32>
    %263 = math.exp %262 : vector<8x32xf32>
    %cst_73 = arith.constant 1.000000e+00 : f32
    %264 = vector.broadcast %cst_73 : f32 to vector<8x32xf32>
    %265 = arith.addf %264, %263 : vector<8x32xf32>
    %266 = tpu.reciprocal %265 : vector<8x32xf32> -> vector<8x32xf32>
    %267 = arith.mulf %0, %266 : vector<8x32xf32>
    %268 = tpu.concatenate %267, %239, %242, %245, %248, %251, %254, %257, %260 in 1 : vector<8x32xf32>, vector<8x32xf32>, vector<8x32xf32>, vector<8x32xf32>, vector<8x32xf32>, vector<8x32xf32>, vector<8x32xf32>, vector<8x32xf32>, vector<8x32xf32> -> vector<8x288xf32>
    %c0_74 = arith.constant 0 : index
    %c0_75 = arith.constant 0 : index
    %269 = vector.load %arg2[%c0_74, %c0_75] : memref<288x64xf32, #tpu.memory_space<vmem>>, vector<288x64xf32>
    %cst_76 = arith.constant dense<0.000000e+00> : vector<8x64xf32>
    %270 = tpu.matmul %268, %269, %cst_76 {dimension_numbers = #tpu.dot_dimension_numbers<[1], [0], [0], [1], [0, 0, 1, 1], [], []>} : vector<8x288xf32>, vector<288x64xf32>, vector<8x64xf32> -> vector<8x64xf32>
    %c0_77 = arith.constant 0 : index
    %c0_78 = arith.constant 0 : index
    %271 = vector.load %arg3[%c0_77, %c0_78] : memref<1x64xf32, #tpu.memory_space<vmem>>, vector<1x64xf32>
    %272 = vector.broadcast %271 : vector<1x64xf32> to vector<8x64xf32>
    %273 = arith.mulf %270, %272 : vector<8x64xf32>
    %c0_79 = arith.constant 0 : index
    %c0_80 = arith.constant 0 : index
    %274 = vector.load %arg4[%c0_79, %c0_80] : memref<1x64xf32, #tpu.memory_space<vmem>>, vector<1x64xf32>
    %275 = vector.broadcast %274 : vector<1x64xf32> to vector<8x64xf32>
    %276 = arith.addf %273, %275 : vector<8x64xf32>
    %cst_81 = arith.constant -2.200000e+00 : f32
    %277 = vector.broadcast %cst_81 : f32 to vector<8x64xf32>
    %278 = arith.cmpf oge, %276, %277 : vector<8x64xf32>
    %279 = arith.extui %278 : vector<8x64xi1> to vector<8x64xi32>
    %280 = arith.sitofp %279 : vector<8x64xi32> to vector<8x64xf32>
    %cst_82 = arith.constant -1.800000e+00 : f32
    %281 = vector.broadcast %cst_82 : f32 to vector<8x64xf32>
    %282 = arith.cmpf oge, %276, %281 : vector<8x64xf32>
    %283 = arith.extui %282 : vector<8x64xi1> to vector<8x64xi32>
    %284 = arith.sitofp %283 : vector<8x64xi32> to vector<8x64xf32>
    %cst_83 = arith.constant -1.400000e+00 : f32
    %285 = vector.broadcast %cst_83 : f32 to vector<8x64xf32>
    %286 = arith.cmpf oge, %276, %285 : vector<8x64xf32>
    %287 = arith.extui %286 : vector<8x64xi1> to vector<8x64xi32>
    %288 = arith.sitofp %287 : vector<8x64xi32> to vector<8x64xf32>
    %cst_84 = arith.constant -1.000000e+00 : f32
    %289 = vector.broadcast %cst_84 : f32 to vector<8x64xf32>
    %290 = arith.cmpf oge, %276, %289 : vector<8x64xf32>
    %291 = arith.extui %290 : vector<8x64xi1> to vector<8x64xi32>
    %292 = arith.sitofp %291 : vector<8x64xi32> to vector<8x64xf32>
    %cst_85 = arith.constant -6.000000e-01 : f32
    %293 = vector.broadcast %cst_85 : f32 to vector<8x64xf32>
    %294 = arith.cmpf oge, %276, %293 : vector<8x64xf32>
    %295 = arith.extui %294 : vector<8x64xi1> to vector<8x64xi32>
    %296 = arith.sitofp %295 : vector<8x64xi32> to vector<8x64xf32>
    %cst_86 = arith.constant -0.199999988 : f32
    %297 = vector.broadcast %cst_86 : f32 to vector<8x64xf32>
    %298 = arith.cmpf oge, %276, %297 : vector<8x64xf32>
    %299 = arith.extui %298 : vector<8x64xi1> to vector<8x64xi32>
    %300 = arith.sitofp %299 : vector<8x64xi32> to vector<8x64xf32>
    %cst_87 = arith.constant 0.200000048 : f32
    %301 = vector.broadcast %cst_87 : f32 to vector<8x64xf32>
    %302 = arith.cmpf oge, %276, %301 : vector<8x64xf32>
    %303 = arith.extui %302 : vector<8x64xi1> to vector<8x64xi32>
    %304 = arith.sitofp %303 : vector<8x64xi32> to vector<8x64xf32>
    %cst_88 = arith.constant 6.000000e-01 : f32
    %305 = vector.broadcast %cst_88 : f32 to vector<8x64xf32>
    %306 = arith.cmpf oge, %276, %305 : vector<8x64xf32>
    %307 = arith.extui %306 : vector<8x64xi1> to vector<8x64xi32>
    %308 = arith.sitofp %307 : vector<8x64xi32> to vector<8x64xf32>
    %cst_89 = arith.constant 1.000000e+00 : f32
    %309 = vector.broadcast %cst_89 : f32 to vector<8x64xf32>
    %310 = arith.cmpf oge, %276, %309 : vector<8x64xf32>
    %311 = arith.extui %310 : vector<8x64xi1> to vector<8x64xi32>
    %312 = arith.sitofp %311 : vector<8x64xi32> to vector<8x64xf32>
    %cst_90 = arith.constant 1.4000001 : f32
    %313 = vector.broadcast %cst_90 : f32 to vector<8x64xf32>
    %314 = arith.cmpf oge, %276, %313 : vector<8x64xf32>
    %315 = arith.extui %314 : vector<8x64xi1> to vector<8x64xi32>
    %316 = arith.sitofp %315 : vector<8x64xi32> to vector<8x64xf32>
    %cst_91 = arith.constant 1.800000e+00 : f32
    %317 = vector.broadcast %cst_91 : f32 to vector<8x64xf32>
    %318 = arith.cmpf oge, %276, %317 : vector<8x64xf32>
    %319 = arith.extui %318 : vector<8x64xi1> to vector<8x64xi32>
    %320 = arith.sitofp %319 : vector<8x64xi32> to vector<8x64xf32>
    %cst_92 = arith.constant 2.200000e+00 : f32
    %321 = vector.broadcast %cst_92 : f32 to vector<8x64xf32>
    %322 = arith.cmpf oge, %276, %321 : vector<8x64xf32>
    %323 = arith.extui %322 : vector<8x64xi1> to vector<8x64xi32>
    %324 = arith.sitofp %323 : vector<8x64xi32> to vector<8x64xf32>
    %325 = arith.subf %280, %284 : vector<8x64xf32>
    %326 = arith.subf %284, %288 : vector<8x64xf32>
    %327 = arith.subf %288, %292 : vector<8x64xf32>
    %328 = arith.subf %292, %296 : vector<8x64xf32>
    %329 = arith.subf %296, %300 : vector<8x64xf32>
    %330 = arith.subf %300, %304 : vector<8x64xf32>
    %331 = arith.subf %304, %308 : vector<8x64xf32>
    %332 = arith.subf %308, %312 : vector<8x64xf32>
    %333 = arith.subf %312, %316 : vector<8x64xf32>
    %334 = arith.subf %316, %320 : vector<8x64xf32>
    %335 = arith.subf %320, %324 : vector<8x64xf32>
    %cst_93 = arith.constant 2.500000e+00 : f32
    %336 = vector.broadcast %cst_93 : f32 to vector<8x64xf32>
    %337 = arith.mulf %276, %336 : vector<8x64xf32>
    %cst_94 = arith.constant -5.500000e+00 : f32
    %338 = vector.broadcast %cst_94 : f32 to vector<8x64xf32>
    %339 = arith.subf %337, %338 : vector<8x64xf32>
    %cst_95 = arith.constant -4.500000e+00 : f32
    %340 = vector.broadcast %cst_95 : f32 to vector<8x64xf32>
    %341 = arith.subf %337, %340 : vector<8x64xf32>
    %cst_96 = arith.constant -3.500000e+00 : f32
    %342 = vector.broadcast %cst_96 : f32 to vector<8x64xf32>
    %343 = arith.subf %337, %342 : vector<8x64xf32>
    %cst_97 = arith.constant -2.500000e+00 : f32
    %344 = vector.broadcast %cst_97 : f32 to vector<8x64xf32>
    %345 = arith.subf %337, %344 : vector<8x64xf32>
    %cst_98 = arith.constant -1.500000e+00 : f32
    %346 = vector.broadcast %cst_98 : f32 to vector<8x64xf32>
    %347 = arith.subf %337, %346 : vector<8x64xf32>
    %cst_99 = arith.constant -0.49999997 : f32
    %348 = vector.broadcast %cst_99 : f32 to vector<8x64xf32>
    %349 = arith.subf %337, %348 : vector<8x64xf32>
    %cst_100 = arith.constant 0.500000119 : f32
    %350 = vector.broadcast %cst_100 : f32 to vector<8x64xf32>
    %351 = arith.subf %337, %350 : vector<8x64xf32>
    %cst_101 = arith.constant 1.500000e+00 : f32
    %352 = vector.broadcast %cst_101 : f32 to vector<8x64xf32>
    %353 = arith.subf %337, %352 : vector<8x64xf32>
    %cst_102 = arith.constant 2.500000e+00 : f32
    %354 = vector.broadcast %cst_102 : f32 to vector<8x64xf32>
    %355 = arith.subf %337, %354 : vector<8x64xf32>
    %cst_103 = arith.constant 3.50000024 : f32
    %356 = vector.broadcast %cst_103 : f32 to vector<8x64xf32>
    %357 = arith.subf %337, %356 : vector<8x64xf32>
    %cst_104 = arith.constant 4.500000e+00 : f32
    %358 = vector.broadcast %cst_104 : f32 to vector<8x64xf32>
    %359 = arith.subf %337, %358 : vector<8x64xf32>
    %cst_105 = arith.constant 1.000000e+00 : f32
    %360 = vector.broadcast %cst_105 : f32 to vector<8x64xf32>
    %361 = arith.subf %360, %341 : vector<8x64xf32>
    %cst_106 = arith.constant 1.000000e+00 : f32
    %362 = vector.broadcast %cst_106 : f32 to vector<8x64xf32>
    %363 = arith.subf %362, %343 : vector<8x64xf32>
    %cst_107 = arith.constant 1.000000e+00 : f32
    %364 = vector.broadcast %cst_107 : f32 to vector<8x64xf32>
    %365 = arith.subf %364, %345 : vector<8x64xf32>
    %cst_108 = arith.constant 1.000000e+00 : f32
    %366 = vector.broadcast %cst_108 : f32 to vector<8x64xf32>
    %367 = arith.subf %366, %347 : vector<8x64xf32>
    %cst_109 = arith.constant 1.000000e+00 : f32
    %368 = vector.broadcast %cst_109 : f32 to vector<8x64xf32>
    %369 = arith.subf %368, %349 : vector<8x64xf32>
    %cst_110 = arith.constant 1.000000e+00 : f32
    %370 = vector.broadcast %cst_110 : f32 to vector<8x64xf32>
    %371 = arith.subf %370, %351 : vector<8x64xf32>
    %cst_111 = arith.constant 1.000000e+00 : f32
    %372 = vector.broadcast %cst_111 : f32 to vector<8x64xf32>
    %373 = arith.subf %372, %353 : vector<8x64xf32>
    %cst_112 = arith.constant 1.000000e+00 : f32
    %374 = vector.broadcast %cst_112 : f32 to vector<8x64xf32>
    %375 = arith.subf %374, %355 : vector<8x64xf32>
    %cst_113 = arith.constant 1.000000e+00 : f32
    %376 = vector.broadcast %cst_113 : f32 to vector<8x64xf32>
    %377 = arith.subf %376, %357 : vector<8x64xf32>
    %cst_114 = arith.constant 1.000000e+00 : f32
    %378 = vector.broadcast %cst_114 : f32 to vector<8x64xf32>
    %379 = arith.subf %378, %359 : vector<8x64xf32>
    %380 = arith.mulf %339, %325 : vector<8x64xf32>
    %381 = arith.mulf %361, %326 : vector<8x64xf32>
    %382 = arith.addf %380, %381 : vector<8x64xf32>
    %383 = arith.mulf %341, %326 : vector<8x64xf32>
    %384 = arith.mulf %363, %327 : vector<8x64xf32>
    %385 = arith.addf %383, %384 : vector<8x64xf32>
    %386 = arith.mulf %343, %327 : vector<8x64xf32>
    %387 = arith.mulf %365, %328 : vector<8x64xf32>
    %388 = arith.addf %386, %387 : vector<8x64xf32>
    %389 = arith.mulf %345, %328 : vector<8x64xf32>
    %390 = arith.mulf %367, %329 : vector<8x64xf32>
    %391 = arith.addf %389, %390 : vector<8x64xf32>
    %392 = arith.mulf %347, %329 : vector<8x64xf32>
    %393 = arith.mulf %369, %330 : vector<8x64xf32>
    %394 = arith.addf %392, %393 : vector<8x64xf32>
    %395 = arith.mulf %349, %330 : vector<8x64xf32>
    %396 = arith.mulf %371, %331 : vector<8x64xf32>
    %397 = arith.addf %395, %396 : vector<8x64xf32>
    %398 = arith.mulf %351, %331 : vector<8x64xf32>
    %399 = arith.mulf %373, %332 : vector<8x64xf32>
    %400 = arith.addf %398, %399 : vector<8x64xf32>
    %401 = arith.mulf %353, %332 : vector<8x64xf32>
    %402 = arith.mulf %375, %333 : vector<8x64xf32>
    %403 = arith.addf %401, %402 : vector<8x64xf32>
    %404 = arith.mulf %355, %333 : vector<8x64xf32>
    %405 = arith.mulf %377, %334 : vector<8x64xf32>
    %406 = arith.addf %404, %405 : vector<8x64xf32>
    %407 = arith.mulf %357, %334 : vector<8x64xf32>
    %408 = arith.mulf %379, %335 : vector<8x64xf32>
    %409 = arith.addf %407, %408 : vector<8x64xf32>
    %cst_115 = arith.constant 1.250000e+00 : f32
    %410 = vector.broadcast %cst_115 : f32 to vector<8x64xf32>
    %411 = arith.mulf %276, %410 : vector<8x64xf32>
    %cst_116 = arith.constant -2.750000e+00 : f32
    %412 = vector.broadcast %cst_116 : f32 to vector<8x64xf32>
    %413 = arith.subf %411, %412 : vector<8x64xf32>
    %cst_117 = arith.constant -2.250000e+00 : f32
    %414 = vector.broadcast %cst_117 : f32 to vector<8x64xf32>
    %415 = arith.subf %411, %414 : vector<8x64xf32>
    %cst_118 = arith.constant -1.750000e+00 : f32
    %416 = vector.broadcast %cst_118 : f32 to vector<8x64xf32>
    %417 = arith.subf %411, %416 : vector<8x64xf32>
    %cst_119 = arith.constant -1.250000e+00 : f32
    %418 = vector.broadcast %cst_119 : f32 to vector<8x64xf32>
    %419 = arith.subf %411, %418 : vector<8x64xf32>
    %cst_120 = arith.constant -7.500000e-01 : f32
    %420 = vector.broadcast %cst_120 : f32 to vector<8x64xf32>
    %421 = arith.subf %411, %420 : vector<8x64xf32>
    %cst_121 = arith.constant -0.249999985 : f32
    %422 = vector.broadcast %cst_121 : f32 to vector<8x64xf32>
    %423 = arith.subf %411, %422 : vector<8x64xf32>
    %cst_122 = arith.constant 0.25000006 : f32
    %424 = vector.broadcast %cst_122 : f32 to vector<8x64xf32>
    %425 = arith.subf %411, %424 : vector<8x64xf32>
    %cst_123 = arith.constant 7.500000e-01 : f32
    %426 = vector.broadcast %cst_123 : f32 to vector<8x64xf32>
    %427 = arith.subf %411, %426 : vector<8x64xf32>
    %cst_124 = arith.constant 1.250000e+00 : f32
    %428 = vector.broadcast %cst_124 : f32 to vector<8x64xf32>
    %429 = arith.subf %411, %428 : vector<8x64xf32>
    %cst_125 = arith.constant 1.75000012 : f32
    %430 = vector.broadcast %cst_125 : f32 to vector<8x64xf32>
    %431 = arith.subf %411, %430 : vector<8x64xf32>
    %cst_126 = arith.constant 1.000000e+00 : f32
    %432 = vector.broadcast %cst_126 : f32 to vector<8x64xf32>
    %433 = arith.subf %432, %415 : vector<8x64xf32>
    %cst_127 = arith.constant 1.000000e+00 : f32
    %434 = vector.broadcast %cst_127 : f32 to vector<8x64xf32>
    %435 = arith.subf %434, %417 : vector<8x64xf32>
    %cst_128 = arith.constant 1.000000e+00 : f32
    %436 = vector.broadcast %cst_128 : f32 to vector<8x64xf32>
    %437 = arith.subf %436, %419 : vector<8x64xf32>
    %cst_129 = arith.constant 1.000000e+00 : f32
    %438 = vector.broadcast %cst_129 : f32 to vector<8x64xf32>
    %439 = arith.subf %438, %421 : vector<8x64xf32>
    %cst_130 = arith.constant 1.000000e+00 : f32
    %440 = vector.broadcast %cst_130 : f32 to vector<8x64xf32>
    %441 = arith.subf %440, %423 : vector<8x64xf32>
    %cst_131 = arith.constant 1.000000e+00 : f32
    %442 = vector.broadcast %cst_131 : f32 to vector<8x64xf32>
    %443 = arith.subf %442, %425 : vector<8x64xf32>
    %cst_132 = arith.constant 1.000000e+00 : f32
    %444 = vector.broadcast %cst_132 : f32 to vector<8x64xf32>
    %445 = arith.subf %444, %427 : vector<8x64xf32>
    %cst_133 = arith.constant 1.000000e+00 : f32
    %446 = vector.broadcast %cst_133 : f32 to vector<8x64xf32>
    %447 = arith.subf %446, %429 : vector<8x64xf32>
    %cst_134 = arith.constant 1.000000e+00 : f32
    %448 = vector.broadcast %cst_134 : f32 to vector<8x64xf32>
    %449 = arith.subf %448, %431 : vector<8x64xf32>
    %450 = arith.mulf %413, %382 : vector<8x64xf32>
    %451 = arith.mulf %433, %385 : vector<8x64xf32>
    %452 = arith.addf %450, %451 : vector<8x64xf32>
    %453 = arith.mulf %415, %385 : vector<8x64xf32>
    %454 = arith.mulf %435, %388 : vector<8x64xf32>
    %455 = arith.addf %453, %454 : vector<8x64xf32>
    %456 = arith.mulf %417, %388 : vector<8x64xf32>
    %457 = arith.mulf %437, %391 : vector<8x64xf32>
    %458 = arith.addf %456, %457 : vector<8x64xf32>
    %459 = arith.mulf %419, %391 : vector<8x64xf32>
    %460 = arith.mulf %439, %394 : vector<8x64xf32>
    %461 = arith.addf %459, %460 : vector<8x64xf32>
    %462 = arith.mulf %421, %394 : vector<8x64xf32>
    %463 = arith.mulf %441, %397 : vector<8x64xf32>
    %464 = arith.addf %462, %463 : vector<8x64xf32>
    %465 = arith.mulf %423, %397 : vector<8x64xf32>
    %466 = arith.mulf %443, %400 : vector<8x64xf32>
    %467 = arith.addf %465, %466 : vector<8x64xf32>
    %468 = arith.mulf %425, %400 : vector<8x64xf32>
    %469 = arith.mulf %445, %403 : vector<8x64xf32>
    %470 = arith.addf %468, %469 : vector<8x64xf32>
    %471 = arith.mulf %427, %403 : vector<8x64xf32>
    %472 = arith.mulf %447, %406 : vector<8x64xf32>
    %473 = arith.addf %471, %472 : vector<8x64xf32>
    %474 = arith.mulf %429, %406 : vector<8x64xf32>
    %475 = arith.mulf %449, %409 : vector<8x64xf32>
    %476 = arith.addf %474, %475 : vector<8x64xf32>
    %cst_135 = arith.constant 0.833333313 : f32
    %477 = vector.broadcast %cst_135 : f32 to vector<8x64xf32>
    %478 = arith.mulf %276, %477 : vector<8x64xf32>
    %cst_136 = arith.constant -1.83333337 : f32
    %479 = vector.broadcast %cst_136 : f32 to vector<8x64xf32>
    %480 = arith.subf %478, %479 : vector<8x64xf32>
    %cst_137 = arith.constant -1.500000e+00 : f32
    %481 = vector.broadcast %cst_137 : f32 to vector<8x64xf32>
    %482 = arith.subf %478, %481 : vector<8x64xf32>
    %cst_138 = arith.constant -1.16666663 : f32
    %483 = vector.broadcast %cst_138 : f32 to vector<8x64xf32>
    %484 = arith.subf %478, %483 : vector<8x64xf32>
    %cst_139 = arith.constant -0.833333313 : f32
    %485 = vector.broadcast %cst_139 : f32 to vector<8x64xf32>
    %486 = arith.subf %478, %485 : vector<8x64xf32>
    %cst_140 = arith.constant -5.000000e-01 : f32
    %487 = vector.broadcast %cst_140 : f32 to vector<8x64xf32>
    %488 = arith.subf %478, %487 : vector<8x64xf32>
    %cst_141 = arith.constant -0.166666657 : f32
    %489 = vector.broadcast %cst_141 : f32 to vector<8x64xf32>
    %490 = arith.subf %478, %489 : vector<8x64xf32>
    %cst_142 = arith.constant 0.166666701 : f32
    %491 = vector.broadcast %cst_142 : f32 to vector<8x64xf32>
    %492 = arith.subf %478, %491 : vector<8x64xf32>
    %cst_143 = arith.constant 5.000000e-01 : f32
    %493 = vector.broadcast %cst_143 : f32 to vector<8x64xf32>
    %494 = arith.subf %478, %493 : vector<8x64xf32>
    %cst_144 = arith.constant 0.833333313 : f32
    %495 = vector.broadcast %cst_144 : f32 to vector<8x64xf32>
    %496 = arith.subf %478, %495 : vector<8x64xf32>
    %cst_145 = arith.constant 1.000000e+00 : f32
    %497 = vector.broadcast %cst_145 : f32 to vector<8x64xf32>
    %498 = arith.subf %497, %482 : vector<8x64xf32>
    %cst_146 = arith.constant 1.000000e+00 : f32
    %499 = vector.broadcast %cst_146 : f32 to vector<8x64xf32>
    %500 = arith.subf %499, %484 : vector<8x64xf32>
    %cst_147 = arith.constant 1.000000e+00 : f32
    %501 = vector.broadcast %cst_147 : f32 to vector<8x64xf32>
    %502 = arith.subf %501, %486 : vector<8x64xf32>
    %cst_148 = arith.constant 1.000000e+00 : f32
    %503 = vector.broadcast %cst_148 : f32 to vector<8x64xf32>
    %504 = arith.subf %503, %488 : vector<8x64xf32>
    %cst_149 = arith.constant 1.000000e+00 : f32
    %505 = vector.broadcast %cst_149 : f32 to vector<8x64xf32>
    %506 = arith.subf %505, %490 : vector<8x64xf32>
    %cst_150 = arith.constant 1.000000e+00 : f32
    %507 = vector.broadcast %cst_150 : f32 to vector<8x64xf32>
    %508 = arith.subf %507, %492 : vector<8x64xf32>
    %cst_151 = arith.constant 1.000000e+00 : f32
    %509 = vector.broadcast %cst_151 : f32 to vector<8x64xf32>
    %510 = arith.subf %509, %494 : vector<8x64xf32>
    %cst_152 = arith.constant 1.000000e+00 : f32
    %511 = vector.broadcast %cst_152 : f32 to vector<8x64xf32>
    %512 = arith.subf %511, %496 : vector<8x64xf32>
    %513 = arith.mulf %480, %452 : vector<8x64xf32>
    %514 = arith.mulf %498, %455 : vector<8x64xf32>
    %515 = arith.addf %513, %514 : vector<8x64xf32>
    %516 = arith.mulf %482, %455 : vector<8x64xf32>
    %517 = arith.mulf %500, %458 : vector<8x64xf32>
    %518 = arith.addf %516, %517 : vector<8x64xf32>
    %519 = arith.mulf %484, %458 : vector<8x64xf32>
    %520 = arith.mulf %502, %461 : vector<8x64xf32>
    %521 = arith.addf %519, %520 : vector<8x64xf32>
    %522 = arith.mulf %486, %461 : vector<8x64xf32>
    %523 = arith.mulf %504, %464 : vector<8x64xf32>
    %524 = arith.addf %522, %523 : vector<8x64xf32>
    %525 = arith.mulf %488, %464 : vector<8x64xf32>
    %526 = arith.mulf %506, %467 : vector<8x64xf32>
    %527 = arith.addf %525, %526 : vector<8x64xf32>
    %528 = arith.mulf %490, %467 : vector<8x64xf32>
    %529 = arith.mulf %508, %470 : vector<8x64xf32>
    %530 = arith.addf %528, %529 : vector<8x64xf32>
    %531 = arith.mulf %492, %470 : vector<8x64xf32>
    %532 = arith.mulf %510, %473 : vector<8x64xf32>
    %533 = arith.addf %531, %532 : vector<8x64xf32>
    %534 = arith.mulf %494, %473 : vector<8x64xf32>
    %535 = arith.mulf %512, %476 : vector<8x64xf32>
    %536 = arith.addf %534, %535 : vector<8x64xf32>
    %cst_153 = arith.constant 0.000000e+00 : f32
    %537 = vector.broadcast %cst_153 : f32 to vector<8x64xf32>
    %538 = arith.subf %537, %276 : vector<8x64xf32>
    %539 = math.exp %538 : vector<8x64xf32>
    %cst_154 = arith.constant 1.000000e+00 : f32
    %540 = vector.broadcast %cst_154 : f32 to vector<8x64xf32>
    %541 = arith.addf %540, %539 : vector<8x64xf32>
    %542 = tpu.reciprocal %541 : vector<8x64xf32> -> vector<8x64xf32>
    %543 = arith.mulf %276, %542 : vector<8x64xf32>
    %544 = tpu.concatenate %543, %515, %518, %521, %524, %527, %530, %533, %536 in 1 : vector<8x64xf32>, vector<8x64xf32>, vector<8x64xf32>, vector<8x64xf32>, vector<8x64xf32>, vector<8x64xf32>, vector<8x64xf32>, vector<8x64xf32>, vector<8x64xf32> -> vector<8x576xf32>
    %c0_155 = arith.constant 0 : index
    %c0_156 = arith.constant 0 : index
    %545 = vector.load %arg5[%c0_155, %c0_156] : memref<576x16xf32, #tpu.memory_space<vmem>>, vector<576x16xf32>
    %cst_157 = arith.constant dense<0.000000e+00> : vector<8x16xf32>
    %546 = tpu.matmul %544, %545, %cst_157 {dimension_numbers = #tpu.dot_dimension_numbers<[1], [0], [0], [1], [0, 0, 1, 1], [], []>} : vector<8x576xf32>, vector<576x16xf32>, vector<8x16xf32> -> vector<8x16xf32>
    %c0_158 = arith.constant 0 : index
    %c0_159 = arith.constant 0 : index
    %547 = vector.load %arg6[%c0_158, %c0_159] : memref<1x16xf32, #tpu.memory_space<vmem>>, vector<1x16xf32>
    %548 = vector.broadcast %547 : vector<1x16xf32> to vector<8x16xf32>
    %549 = arith.mulf %546, %548 : vector<8x16xf32>
    %c0_160 = arith.constant 0 : index
    %c0_161 = arith.constant 0 : index
    %550 = vector.load %arg7[%c0_160, %c0_161] : memref<1x16xf32, #tpu.memory_space<vmem>>, vector<1x16xf32>
    %551 = vector.broadcast %550 : vector<1x16xf32> to vector<8x16xf32>
    %552 = arith.addf %549, %551 : vector<8x16xf32>
    %c0_162 = arith.constant 0 : index
    %c0_163 = arith.constant 0 : index
    %553 = vector.load %arg8[%c0_162, %c0_163] : memref<8x16xf32, #tpu.memory_space<vmem>>, vector<8x16xf32>
    tpu.vector_store %arg8[%c0_162, %c0_163], %552 {strides = array<i32>} : memref<8x16xf32, #tpu.memory_space<vmem>>, vector<8x16xf32>,
    return
  }
  func.func @transform_0(%arg0: i32) -> (i32, i32) {
    %c0_i32 = arith.constant 0 : i32
    %c0_i32_0 = arith.constant 0 : i32
    return %arg0, %c0_i32 : i32, i32
  }
  func.func @transform_1(%arg0: i32) -> (i32, i32) {
    %c0_i32 = arith.constant 0 : i32
    %c0_i32_0 = arith.constant 0 : i32
    %c0_i32_1 = arith.constant 0 : i32
    return %c0_i32, %c0_i32_0 : i32, i32
  }
  func.func @transform_2(%arg0: i32) -> (i32, i32) {
    %c0_i32 = arith.constant 0 : i32
    %c0_i32_0 = arith.constant 0 : i32
    %c0_i32_1 = arith.constant 0 : i32
    return %c0_i32, %c0_i32_0 : i32, i32
  }
  func.func @transform_3(%arg0: i32) -> (i32, i32) {
    %c0_i32 = arith.constant 0 : i32
    %c0_i32_0 = arith.constant 0 : i32
    %c0_i32_1 = arith.constant 0 : i32
    return %c0_i32, %c0_i32_0 : i32, i32
  }
  func.func @transform_4(%arg0: i32) -> (i32, i32) {
    %c0_i32 = arith.constant 0 : i32
    %c0_i32_0 = arith.constant 0 : i32
    %c0_i32_1 = arith.constant 0 : i32
    return %c0_i32, %c0_i32_0 : i32, i32
  }
  func.func @transform_5(%arg0: i32) -> (i32, i32) {
    %c0_i32 = arith.constant 0 : i32
    %c0_i32_0 = arith.constant 0 : i32
    %c0_i32_1 = arith.constant 0 : i32
    return %c0_i32, %c0_i32_0 : i32, i32
  }
  func.func @transform_6(%arg0: i32) -> (i32, i32) {
    %c0_i32 = arith.constant 0 : i32
    %c0_i32_0 = arith.constant 0 : i32
    %c0_i32_1 = arith.constant 0 : i32
    return %c0_i32, %c0_i32_0 : i32, i32
  }
  func.func @transform_7(%arg0: i32) -> (i32, i32) {
    %c0_i32 = arith.constant 0 : i32
    %c0_i32_0 = arith.constant 0 : i32
    return %arg0, %c0_i32 : i32, i32
  }
}

</mosaic_0001>

<llo_original>
// kernel: tpu_custom_call.1
$region0: #{tpu_custom_call.1}
  #allocation0 [shape = 'u32[]', space=smem, size = 0x4, offset = 0x4, fixed_abs, tag = 'smem constant byte address 0x4 - core index']
  #allocation1 [shape = 'u32[144,128]{1,0:T(1,128)}', space=vmem, size = 0x12000, scoped, tag = 'internal scratch']
  %s0 = inlined_call_operand.vmem [shape: f32[16,32], index: 0, kind: input, shape index: {}]
  %s1 = inlined_call_operand.vmem [shape: f32[288,64], index: 1, kind: input, shape index: {}]
  %s2 = inlined_call_operand.vmem [shape: f32[1,64], index: 2, kind: input, shape index: {}]
  %s3 = inlined_call_operand.vmem [shape: f32[1,64], index: 3, kind: input, shape index: {}]
  %s4 = inlined_call_operand.vmem [shape: f32[576,16], index: 4, kind: input, shape index: {}]
  %s5 = inlined_call_operand.vmem [shape: f32[1,16], index: 5, kind: input, shape index: {}]
  %s6 = inlined_call_operand.vmem [shape: f32[1,16], index: 6, kind: input, shape index: {}]
  %s7 = inlined_call_operand.hbm [shape: f32[16,16], index: 7, kind: output, shape index: {}]
  %s8 = sld [smem:[#allocation0]]
  $region61: #{tpu_custom_call.1} parent=0
    _
  %s10 = ssub.s32 1, %s8
  %s11 = scalar_select 0, %s10, %s8
  $region1: #{tpu_custom_call.1} parent=0
    #allocation2 [shape = 'u8[8192]{0}', space=vmem, size = 0x2000, scoped, tag = 'output window, operand 0']
    #allocation3 [shape = 's32[2]{0}', space=sflag, size = 0x8, scoped, tag = 'scoped memory for tpu_custom_call.1']
    %12 = vsyncpa [#allocation3], 0
    %s13 = scalar_lea.sflag [#allocation3], 1
    %14 = vsyncpa %s13, 0
    loop: start=0, step=1, limit=4
    $region2: #{tpu_custom_call.1} parent=1 // loop_pre_header
      _
    $region3: #{tpu_custom_call.1} parent=1 // loop_header
      %s16 = sphi 0, %s20
      %p17 = scmp.ge.s32.totalorder %s16, 4
      %s26 = sphi 0, %s28
      %s29 = sphi 0, %s26
      %s30 = sphi 0, %s29
      %s46 = sphi 0, %s30
      %s50 = sphi 0, %s50
      %s52 = sphi 0, %s50
      %s53 = sphi 0, %s52
      %s67 = sphi 0, %s53
      %s71 = sphi 0, %s71
      %s73 = sphi 0, %s71
      %s74 = sphi 0, %s73
      %s88 = sphi 0, %s74
      %s92 = sphi 0, %s92
      %s94 = sphi 0, %s92
      %s95 = sphi 0, %s94
      %s109 = sphi 0, %s95
      %s113 = sphi 0, %s113
      %s115 = sphi 0, %s113
      %s116 = sphi 0, %s115
      %s130 = sphi 0, %s116
      %s134 = sphi 0, %s134
      %s136 = sphi 0, %s134
      %s137 = sphi 0, %s136
      %s151 = sphi 0, %s137
      %s155 = sphi 0, %s155
      %s157 = sphi 0, %s155
      %s158 = sphi 0, %s157
      %s172 = sphi 0, %s158
      %s178 = sphi 0, %s180
      %s181 = sphi 0, %s178
      %s182 = sphi 0, %s181
      %s198 = sphi 0, %s182
    $region4: #{tpu_custom_call.1} parent=1 // loop_header_branch
      %19 = sbr.rel (%p17) target = $region8
    $region5: #{tpu_custom_call.1} parent=1 // loop_body
      %s21 = ssub.s32 %s16, 1
      %s22 = ssub.s32 %s16, 2
      %s23 = sadd.s32 %s16, 1
      %s24 = ssub.s32 %s16, %s23
      %p25 = scmp.eq.s32.totalorder %s24, 0
      %s27 = sadd.s32 %s26, 1
      %s28 = scalar_select %p25, %s26, %s27
      %p31 = pneg %p25
      %p32 = scmp.eq.s32.totalorder %s16, 1
      %p33 = por %p31, %p32
      %p34 = scmp.ne.s32.totalorder %s26, %s29
      %p35 = scmp.eq.s32.totalorder %s16, 0
      %p36 = por %p34, %p35
      %p37 = scmp.ne.s32.totalorder %s26, %s29
      %p38 = scmp.eq.s32.totalorder %s21, 1
      %p39 = por %p37, %p38
      %p40 = scmp.ne.s32.totalorder %s29, %s30
      %p41 = scmp.eq.s32.totalorder %s21, 0
      %p42 = por %p40, %p41
      %p43 = scmp.ne.s32.totalorder %s29, %s30
      %p44 = scmp.eq.s32.totalorder %s22, 1
      %p45 = por %p43, %p44
      %p47 = scmp.ne.s32.totalorder %s30, %s46
      %p48 = scmp.eq.s32.totalorder %s22, 0
      %p49 = por %p47, %p48
      %s51 = sadd.s32 %s50, 1
      %p54 = scmp.eq.s32.totalorder %s16, 1
      %p55 = scmp.ne.s32.totalorder %s50, %s52
      %p56 = scmp.eq.s32.totalorder %s16, 0
      %p57 = por %p55, %p56
      %p58 = scmp.ne.s32.totalorder %s50, %s52
      %p59 = scmp.eq.s32.totalorder %s21, 1
      %p60 = por %p58, %p59
      %p61 = scmp.ne.s32.totalorder %s52, %s53
      %p62 = scmp.eq.s32.totalorder %s21, 0
      %p63 = por %p61, %p62
      %p64 = scmp.ne.s32.totalorder %s52, %s53
      %p65 = scmp.eq.s32.totalorder %s22, 1
      %p66 = por %p64, %p65
      %p68 = scmp.ne.s32.totalorder %s53, %s67
      %p69 = scmp.eq.s32.totalorder %s22, 0
      %p70 = por %p68, %p69
      %s72 = sadd.s32 %s71, 1
      %p75 = scmp.eq.s32.totalorder %s16, 1
      %p76 = scmp.ne.s32.totalorder %s71, %s73
      %p77 = scmp.eq.s32.totalorder %s16, 0
      %p78 = por %p76, %p77
      %p79 = scmp.ne.s32.totalorder %s71, %s73
      %p80 = scmp.eq.s32.totalorder %s21, 1
      %p81 = por %p79, %p80
      %p82 = scmp.ne.s32.totalorder %s73, %s74
      %p83 = scmp.eq.s32.totalorder %s21, 0
      %p84 = por %p82, %p83
      %p85 = scmp.ne.s32.totalorder %s73, %s74
      %p86 = scmp.eq.s32.totalorder %s22, 1
      %p87 = por %p85, %p86
      %p89 = scmp.ne.s32.totalorder %s74, %s88
      %p90 = scmp.eq.s32.totalorder %s22, 0
      %p91 = por %p89, %p90
      %s93 = sadd.s32 %s92, 1
      %p96 = scmp.eq.s32.totalorder %s16, 1
      %p97 = scmp.ne.s32.totalorder %s92, %s94
      %p98 = scmp.eq.s32.totalorder %s16, 0
      %p99 = por %p97, %p98
      %p100 = scmp.ne.s32.totalorder %s92, %s94
      %p101 = scmp.eq.s32.totalorder %s21, 1
      %p102 = por %p100, %p101
      %p103 = scmp.ne.s32.totalorder %s94, %s95
      %p104 = scmp.eq.s32.totalorder %s21, 0
      %p105 = por %p103, %p104
      %p106 = scmp.ne.s32.totalorder %s94, %s95
      %p107 = scmp.eq.s32.totalorder %s22, 1
      %p108 = por %p106, %p107
      %p110 = scmp.ne.s32.totalorder %s95, %s109
      %p111 = scmp.eq.s32.totalorder %s22, 0
      %p112 = por %p110, %p111
      %s114 = sadd.s32 %s113, 1
      %p117 = scmp.eq.s32.totalorder %s16, 1
      %p118 = scmp.ne.s32.totalorder %s113, %s115
      %p119 = scmp.eq.s32.totalorder %s16, 0
      %p120 = por %p118, %p119
      %p121 = scmp.ne.s32.totalorder %s113, %s115
      %p122 = scmp.eq.s32.totalorder %s21, 1
      %p123 = por %p121, %p122
      %p124 = scmp.ne.s32.totalorder %s115, %s116
      %p125 = scmp.eq.s32.totalorder %s21, 0
      %p126 = por %p124, %p125
      %p127 = scmp.ne.s32.totalorder %s115, %s116
      %p128 = scmp.eq.s32.totalorder %s22, 1
      %p129 = por %p127, %p128
      %p131 = scmp.ne.s32.totalorder %s116, %s130
      %p132 = scmp.eq.s32.totalorder %s22, 0
      %p133 = por %p131, %p132
      %s135 = sadd.s32 %s134, 1
      %p138 = scmp.eq.s32.totalorder %s16, 1
      %p139 = scmp.ne.s32.totalorder %s134, %s136
      %p140 = scmp.eq.s32.totalorder %s16, 0
      %p141 = por %p139, %p140
      %p142 = scmp.ne.s32.totalorder %s134, %s136
      %p143 = scmp.eq.s32.totalorder %s21, 1
      %p144 = por %p142, %p143
      %p145 = scmp.ne.s32.totalorder %s136, %s137
      %p146 = scmp.eq.s32.totalorder %s21, 0
      %p147 = por %p145, %p146
      %p148 = scmp.ne.s32.totalorder %s136, %s137
      %p149 = scmp.eq.s32.totalorder %s22, 1
      %p150 = por %p148, %p149
      %p152 = scmp.ne.s32.totalorder %s137, %s151
      %p153 = scmp.eq.s32.totalorder %s22, 0
      %p154 = por %p152, %p153
      %s156 = sadd.s32 %s155, 1
      %p159 = scmp.eq.s32.totalorder %s16, 1
      %p160 = scmp.ne.s32.totalorder %s155, %s157
      %p161 = scmp.eq.s32.totalorder %s16, 0
      %p162 = por %p160, %p161
      %p163 = scmp.ne.s32.totalorder %s155, %s157
      %p164 = scmp.eq.s32.totalorder %s21, 1
      %p165 = por %p163, %p164
      %p166 = scmp.ne.s32.totalorder %s157, %s158
      %p167 = scmp.eq.s32.totalorder %s21, 0
      %p168 = por %p166, %p167
      %p169 = scmp.ne.s32.totalorder %s157, %s158
      %p170 = scmp.eq.s32.totalorder %s22, 1
      %p171 = por %p169, %p170
      %p173 = scmp.ne.s32.totalorder %s158, %s172
      %p174 = scmp.eq.s32.totalorder %s22, 0
      %p175 = por %p173, %p174
      %s176 = ssub.s32 %s16, %s23
      %p177 = scmp.eq.s32.totalorder %s176, 0
      %s179 = sadd.s32 %s178, 1
      %s180 = scalar_select %p177, %s178, %s179
      %p183 = pneg %p177
      %p184 = scmp.eq.s32.totalorder %s16, 1
      %p185 = por %p183, %p184
      %p186 = scmp.ne.s32.totalorder %s178, %s181
      %p187 = scmp.eq.s32.totalorder %s16, 0
      %p188 = por %p186, %p187
      %p189 = scmp.ne.s32.totalorder %s178, %s181
      %p190 = scmp.eq.s32.totalorder %s21, 1
      %p191 = por %p189, %p190
      %p192 = scmp.ne.s32.totalorder %s181, %s182
      %p193 = scmp.eq.s32.totalorder %s21, 0
      %p194 = por %p192, %p193
      %p195 = scmp.ne.s32.totalorder %s181, %s182
      %p196 = scmp.eq.s32.totalorder %s22, 1
      %p197 = por %p195, %p196
      %p199 = scmp.ne.s32.totalorder %s182, %s198
      %p200 = scmp.eq.s32.totalorder %s22, 0
      %p201 = por %p199, %p200
      %p202 = scmp.le.s32.totalorder 1, %s16
      %p203 = scmp.lt.s32.totalorder %s16, 3
      %p204 = pnand %p202, %p203
      %p205 = pneg %p204
      // Predicated region
      $region9: #{tpu_custom_call.1} parent=5 // pred_check
        _
      $region10: #{tpu_custom_call.1} parent=5 // pred_check_branch
        %207 = sbr.rel (%p204) target = $region12
      $region11: #{tpu_custom_call.1} parent=5 // pred_region
        %s208 = ssub.s32 %s16, 1
        // Predicated region
        $region13: #{tpu_custom_call.1} parent=11 // pred_check
          %p209 = pneg %p63
        $region14: #{tpu_custom_call.1} parent=11 // pred_check_branch
          %211 = sbr.rel (%p209) target = $region16
        $region15: #{tpu_custom_call.1} parent=11 // pred_region
          _
        $region16: #{tpu_custom_call.1} parent=11 // pred_fallthru
          _
        // Predicated region
        $region17: #{tpu_custom_call.1} parent=11 // pred_check
          %p212 = pneg %p84
        $region18: #{tpu_custom_call.1} parent=11 // pred_check_branch
          %214 = sbr.rel (%p212) target = $region20
        $region19: #{tpu_custom_call.1} parent=11 // pred_region
          _
        $region20: #{tpu_custom_call.1} parent=11 // pred_fallthru
          _
        // Predicated region
        $region21: #{tpu_custom_call.1} parent=11 // pred_check
          %p215 = pneg %p105
        $region22: #{tpu_custom_call.1} parent=11 // pred_check_branch
          %217 = sbr.rel (%p215) target = $region24
        $region23: #{tpu_custom_call.1} parent=11 // pred_region
          _
        $region24: #{tpu_custom_call.1} parent=11 // pred_fallthru
          _
        // Predicated region
        $region25: #{tpu_custom_call.1} parent=11 // pred_check
          %p218 = pneg %p126
        $region26: #{tpu_custom_call.1} parent=11 // pred_check_branch
          %220 = sbr.rel (%p218) target = $region28
        $region27: #{tpu_custom_call.1} parent=11 // pred_region
          _
        $region28: #{tpu_custom_call.1} parent=11 // pred_fallthru
          _
        // Predicated region
        $region29: #{tpu_custom_call.1} parent=11 // pred_check
          %p221 = pneg %p147
        $region30: #{tpu_custom_call.1} parent=11 // pred_check_branch
          %223 = sbr.rel (%p221) target = $region32
        $region31: #{tpu_custom_call.1} parent=11 // pred_region
          _
        $region32: #{tpu_custom_call.1} parent=11 // pred_fallthru
          _
        // Predicated region
        $region33: #{tpu_custom_call.1} parent=11 // pred_check
          %p224 = pneg %p168
        $region34: #{tpu_custom_call.1} parent=11 // pred_check_branch
          %226 = sbr.rel (%p224) target = $region36
        $region35: #{tpu_custom_call.1} parent=11 // pred_region
          _
        $region36: #{tpu_custom_call.1} parent=11 // pred_fallthru
          _
      $region12: #{tpu_custom_call.1} parent=5 // pred_fallthru
        _
      %p227 = scmp.lt.s32.totalorder %s16, 2
      // Predicated region
      $region37: #{tpu_custom_call.1} parent=5 // pred_check
        %p228 = pneg %p227
      $region38: #{tpu_custom_call.1} parent=5 // pred_check_branch
        %230 = sbr.rel (%p228) target = $region40
      $region39: #{tpu_custom_call.1} parent=5 // pred_region
        // Predicated region
        $region41: #{tpu_custom_call.1} parent=39 // pred_check
          %p231 = pneg %p36
        $region42: #{tpu_custom_call.1} parent=39 // pred_check_branch
          %233 = sbr.rel (%p231) target = $region44
        $region43: #{tpu_custom_call.1} parent=39 // pred_region
          %p234 = scmp.lt.s32.totalorder %s16, 1
          %s235 = scalar_select %p234, %s16, 1
          %s236 = smul.addr %s235, 8
          %s237 = scalar_lea.vmem %s0, %s236
        $region44: #{tpu_custom_call.1} parent=39 // pred_fallthru
          _
      $region40: #{tpu_custom_call.1} parent=5 // pred_fallthru
        _
      %p238 = scmp.le.s32.totalorder 1, %s16
      %p239 = scmp.lt.s32.totalorder %s16, 3
      %p240 = pnand %p238, %p239
      %p241 = pneg %p240
      // Predicated region
      $region45: #{tpu_custom_call.1} parent=5 // pred_check
        _
      $region46: #{tpu_custom_call.1} parent=5 // pred_check_branch
        %243 = sbr.rel (%p240) target = $region48
      $region47: #{tpu_custom_call.1} parent=5 // pred_region
        %s244 = ssub.s32 %s16, 1
        %p245 = scmp.lt.s32.totalorder %s21, 1
        %s246 = scalar_select %p245, %s21, 1
        %s247 = smul.addr %s246, 8
        %s248 = scalar_lea.vmem %s0, %s247
        %p249 = pneg %p42
        %p250 = pneg %p39
        %p251 = pneg %p63
        %p252 = pneg %p60
        %p253 = pneg %p84
        %p254 = pneg %p81
        %p255 = pneg %p105
        %p256 = pneg %p102
        %p257 = pneg %p126
        %p258 = pneg %p123
        %p259 = pneg %p147
        %p260 = pneg %p144
        %p261 = pneg %p168
        %p262 = pneg %p165
        %p263 = pneg %p194
        %p264 = pneg %p191
        %s265 = sand.u32 %s181, 1
        %s266 = scalar_lea.sflag [#allocation3], %s265
        %s267 = sand.u32 %s181, 1
        %s268 = smul.addr %s267, 8
        %s269 = scalar_lea.vmem [#allocation2], %s268
        %p270 = scmp.lt.s32.totalorder %s21, 1
        %s271 = scalar_select %p270, %s21, 1
        %s272 = smul.addr %s271, 8
        %s273 = scalar_lea.vmem %s0, %s272
        %v274 = vld [vmem:[%s273] sm:$0xff]
        %vm275 = vcmp.ge.f32.partialorder %v274, -2.2
        %v276 = vsel %vm275, 1, 0
        %v277 = vcvt.s32.f32 %v276
        %vm278 = vcmp.ge.f32.partialorder %v274, -1.8
        %v279 = vsel %vm278, 1, 0
        %v280 = vcvt.s32.f32 %v279
        %vm281 = vcmp.ge.f32.partialorder %v274, -1.4
        %v282 = vsel %vm281, 1, 0
        %v283 = vcvt.s32.f32 %v282
        %vm284 = vcmp.ge.f32.partialorder %v274, -1.0
        %v285 = vsel %vm284, 1, 0
        %v286 = vcvt.s32.f32 %v285
        %vm287 = vcmp.ge.f32.partialorder %v274, -0.6
        %v288 = vsel %vm287, 1, 0
        %v289 = vcvt.s32.f32 %v288
        %vm290 = vcmp.ge.f32.partialorder %v274, -0.19999999
        %v291 = vsel %vm290, 1, 0
        %v292 = vcvt.s32.f32 %v291
        %vm293 = vcmp.ge.f32.partialorder %v274, 0.20000005
        %v294 = vsel %vm293, 1, 0
        %v295 = vcvt.s32.f32 %v294
        %vm296 = vcmp.ge.f32.partialorder %v274, 0.6
        %v297 = vsel %vm296, 1, 0
        %v298 = vcvt.s32.f32 %v297
        %vm299 = vcmp.ge.f32.partialorder %v274, 1.0
        %v300 = vsel %vm299, 1, 0
        %v301 = vcvt.s32.f32 %v300
        %vm302 = vcmp.ge.f32.partialorder %v274, 1.4000001
        %v303 = vsel %vm302, 1, 0
        %v304 = vcvt.s32.f32 %v303
        %vm305 = vcmp.ge.f32.partialorder %v274, 1.8
        %v306 = vsel %vm305, 1, 0
        %v307 = vcvt.s32.f32 %v306
        %vm308 = vcmp.ge.f32.partialorder %v274, 2.2
        %v309 = vsel %vm308, 1, 0
        %v310 = vcvt.s32.f32 %v309
        %v311 = vsub.f32 %v277, %v280
        %v312 = vsub.f32 %v280, %v283
        %v313 = vsub.f32 %v283, %v286
        %v314 = vsub.f32 %v286, %v289
        %v315 = vsub.f32 %v289, %v292
        %v316 = vsub.f32 %v292, %v295
        %v317 = vsub.f32 %v295, %v298
        %v318 = vsub.f32 %v298, %v301
        %v319 = vsub.f32 %v301, %v304
        %v320 = vsub.f32 %v304, %v307
        %v321 = vsub.f32 %v307, %v310
        %v322 = vmul.f32 %v274, 2.5
        %v323 = vsub.f32 %v322, -5.5
        %v324 = vsub.f32 %v322, -4.5
        %v325 = vsub.f32 %v322, -3.5
        %v326 = vsub.f32 %v322, -2.5
        %v327 = vsub.f32 %v322, -1.5
        %v328 = vsub.f32 %v322, -0.49999997
        %v329 = vsub.f32 %v322, 0.5000001
        %v330 = vsub.f32 %v322, 1.5
        %v331 = vsub.f32 %v322, 2.5
        %v332 = vsub.f32 %v322, 3.5000002
        %v333 = vsub.f32 %v322, 4.5
        %v334 = vsub.f32 1.0, %v324
        %v335 = vsub.f32 1.0, %v325
        %v336 = vsub.f32 1.0, %v326
        %v337 = vsub.f32 1.0, %v327
        %v338 = vsub.f32 1.0, %v328
        %v339 = vsub.f32 1.0, %v329
        %v340 = vsub.f32 1.0, %v330
        %v341 = vsub.f32 1.0, %v331
        %v342 = vsub.f32 1.0, %v332
        %v343 = vsub.f32 1.0, %v333
        %v344 = vmul.f32 %v323, %v311
        %v345 = vmul.f32 %v334, %v312
        %v346 = vadd.f32 %v344, %v345
        %v347 = vmul.f32 %v324, %v312
        %v348 = vmul.f32 %v335, %v313
        %v349 = vadd.f32 %v347, %v348
        %v350 = vmul.f32 %v325, %v313
        %v351 = vmul.f32 %v336, %v314
        %v352 = vadd.f32 %v350, %v351
        %v353 = vmul.f32 %v326, %v314
        %v354 = vmul.f32 %v337, %v315
        %v355 = vadd.f32 %v353, %v354
        %v356 = vmul.f32 %v327, %v315
        %v357 = vmul.f32 %v338, %v316
        %v358 = vadd.f32 %v356, %v357
        %v359 = vmul.f32 %v328, %v316
        %v360 = vmul.f32 %v339, %v317
        %v361 = vadd.f32 %v359, %v360
        %v362 = vmul.f32 %v329, %v317
        %v363 = vmul.f32 %v340, %v318
        %v364 = vadd.f32 %v362, %v363
        %v365 = vmul.f32 %v330, %v318
        %v366 = vmul.f32 %v341, %v319
        %v367 = vadd.f32 %v365, %v366
        %v368 = vmul.f32 %v331, %v319
        %v369 = vmul.f32 %v342, %v320
        %v370 = vadd.f32 %v368, %v369
        %v371 = vmul.f32 %v332, %v320
        %v372 = vmul.f32 %v343, %v321
        %v373 = vadd.f32 %v371, %v372
        %v374 = vmul.f32 %v274, 1.25
        %v375 = vsub.f32 %v374, -2.75
        %v376 = vsub.f32 %v374, -2.25
        %v377 = vsub.f32 %v374, -1.75
        %v378 = vsub.f32 %v374, -1.25
        %v379 = vsub.f32 %v374, -0.75
        %v380 = vsub.f32 %v374, -0.24999999
        %v381 = vsub.f32 %v374, 0.25000006
        %v382 = vsub.f32 %v374, 0.75
        %v383 = vsub.f32 %v374, 1.25
        %v384 = vsub.f32 %v374, 1.7500001
        %v385 = vsub.f32 1.0, %v376
        %v386 = vsub.f32 1.0, %v377
        %v387 = vsub.f32 1.0, %v378
        %v388 = vsub.f32 1.0, %v379
        %v389 = vsub.f32 1.0, %v380
        %v390 = vsub.f32 1.0, %v381
        %v391 = vsub.f32 1.0, %v382
        %v392 = vsub.f32 1.0, %v383
        %v393 = vsub.f32 1.0, %v384
        %v394 = vmul.f32 %v375, %v346
        %v395 = vmul.f32 %v385, %v349
        %v396 = vadd.f32 %v394, %v395
        %v397 = vmul.f32 %v376, %v349
        %v398 = vmul.f32 %v386, %v352
        %v399 = vadd.f32 %v397, %v398
        %v400 = vmul.f32 %v377, %v352
        %v401 = vmul.f32 %v387, %v355
        %v402 = vadd.f32 %v400, %v401
        %v403 = vmul.f32 %v378, %v355
        %v404 = vmul.f32 %v388, %v358
        %v405 = vadd.f32 %v403, %v404
        %v406 = vmul.f32 %v379, %v358
        %v407 = vmul.f32 %v389, %v361
        %v408 = vadd.f32 %v406, %v407
        %v409 = vmul.f32 %v380, %v361
        %v410 = vmul.f32 %v390, %v364
        %v411 = vadd.f32 %v409, %v410
        %v412 = vmul.f32 %v381, %v364
        %v413 = vmul.f32 %v391, %v367
        %v414 = vadd.f32 %v412, %v413
        %v415 = vmul.f32 %v382, %v367
        %v416 = vmul.f32 %v392, %v370
        %v417 = vadd.f32 %v415, %v416
        %v418 = vmul.f32 %v383, %v370
        %v419 = vmul.f32 %v393, %v373
        %v420 = vadd.f32 %v418, %v419
        %v421 = vmul.f32 %v274, 0.8333333
        %v422 = vsub.f32 %v421, -1.8333334
        %v423 = vsub.f32 %v421, -1.5
        %v424 = vsub.f32 %v421, -1.1666666
        %v425 = vsub.f32 %v421, -0.8333333
        %v426 = vsub.f32 %v421, -0.5
        %v427 = vsub.f32 %v421, -0.16666666
        %v428 = vsub.f32 %v421, 0.1666667
        %v429 = vsub.f32 %v421, 0.5
        %v430 = vsub.f32 %v421, 0.8333333
        %v431 = vsub.f32 1.0, %v423
        %v432 = vsub.f32 1.0, %v424
        %v433 = vsub.f32 1.0, %v425
        %v434 = vsub.f32 1.0, %v426
        %v435 = vsub.f32 1.0, %v427
        %v436 = vsub.f32 1.0, %v428
        %v437 = vsub.f32 1.0, %v429
        %v438 = vsub.f32 1.0, %v430
        %v439 = vmul.f32 %v422, %v396
        %v440 = vmul.f32 %v431, %v399
        %v441 = vadd.f32 %v439, %v440
        %v442 = vmul.f32 %v423, %v399
        %v443 = vmul.f32 %v432, %v402
        %v444 = vadd.f32 %v442, %v443
        %v445 = vmul.f32 %v424, %v402
        %v446 = vmul.f32 %v433, %v405
        %v447 = vadd.f32 %v445, %v446
        %v448 = vmul.f32 %v425, %v405
        %v449 = vmul.f32 %v434, %v408
        %v450 = vadd.f32 %v448, %v449
        %v451 = vmul.f32 %v426, %v408
        %v452 = vmul.f32 %v435, %v411
        %v453 = vadd.f32 %v451, %v452
        %v454 = vmul.f32 %v427, %v411
        %v455 = vmul.f32 %v436, %v414
        %v456 = vadd.f32 %v454, %v455
        %v457 = vmul.f32 %v428, %v414
        %v458 = vmul.f32 %v437, %v417
        %v459 = vadd.f32 %v457, %v458
        %v460 = vmul.f32 %v429, %v417
        %v461 = vmul.f32 %v438, %v420
        %v462 = vadd.f32 %v460, %v461
        %v463 = vsub.f32 0.0, %v274
        %v464 = vmul.f32 %v463, 1.442695
        %v465 = vpow.pop %v464
        %v466 = vadd.f32 %v465, 1.0
        %v467 = vrcp.pop %v466
        %v468 = vmul.f32 %v274, %v467
        %470 = vrot.lane.b32.xlu0 %v441, 32
        %v471 = vpop.permute.xlu0 %470
        %474 = vrot.lane.b32.xlu0 %v444, 64
        %v475 = vpop.permute.xlu0 %474
        %478 = vrot.lane.b32.xlu0 %v447, 96
        %v479 = vpop.permute.xlu0 %478
        %482 = vrot.lane.b32.xlu0 %v453, 32
        %v483 = vpop.permute.xlu0 %482
        %486 = vrot.lane.b32.xlu0 %v456, 64
        %v487 = vpop.permute.xlu0 %486
        %490 = vrot.lane.b32.xlu0 %v459, 96
        %v491 = vpop.permute.xlu0 %490
        %vm493 = vcmask 261120
        %v494 = vsel %vm493, %v468, %v471
        %vm495 = vcmask 523264
        %v496 = vsel %vm495, %v494, %v475
        %vm497 = vcmask 785408
        %v498 = vsel %vm497, %v496, %v479
        %v499 = vsel %vm493, %v450, %v483
        %v500 = vsel %vm495, %v499, %v487
        %v501 = vsel %vm497, %v500, %v491
        %v502 = vld [vmem:[%s1] sm:$0xff]
        %v503 = vld [vmem:[%s1 + $0x8] sm:$0xff]
        %v504 = vld [vmem:[%s1 + $0x10] sm:$0xff]
        %v505 = vld [vmem:[%s1 + $0x18] sm:$0xff]
        %v506 = vld [vmem:[%s1 + $0x20] sm:$0xff]
        %v507 = vld [vmem:[%s1 + $0x28] sm:$0xff]
        %v508 = vld [vmem:[%s1 + $0x30] sm:$0xff]
        %v509 = vld [vmem:[%s1 + $0x38] sm:$0xff]
        %v510 = vld [vmem:[%s1 + $0x40] sm:$0xff]
        %v511 = vld [vmem:[%s1 + $0x48] sm:$0xff]
        %v512 = vld [vmem:[%s1 + $0x50] sm:$0xff]
        %v513 = vld [vmem:[%s1 + $0x58] sm:$0xff]
        %v514 = vld [vmem:[%s1 + $0x60] sm:$0xff]
        %v515 = vld [vmem:[%s1 + $0x68] sm:$0xff]
        %v516 = vld [vmem:[%s1 + $0x70] sm:$0xff]
        %v517 = vld [vmem:[%s1 + $0x78] sm:$0xff]
        %v518 = vld [vmem:[%s1 + $0x80] sm:$0xff]
        %v519 = vld [vmem:[%s1 + $0x88] sm:$0xff]
        %v520 = vld [vmem:[%s1 + $0x90] sm:$0xff]
        %v521 = vld [vmem:[%s1 + $0x98] sm:$0xff]
        %v522 = vld [vmem:[%s1 + $0xa0] sm:$0xff]
        %v523 = vld [vmem:[%s1 + $0xa8] sm:$0xff]
        %v524 = vld [vmem:[%s1 + $0xb0] sm:$0xff]
        %v525 = vld [vmem:[%s1 + $0xb8] sm:$0xff]
        %v526 = vld [vmem:[%s1 + $0xc0] sm:$0xff]
        %v527 = vld [vmem:[%s1 + $0xc8] sm:$0xff]
        %v528 = vld [vmem:[%s1 + $0xd0] sm:$0xff]
        %v529 = vld [vmem:[%s1 + $0xd8] sm:$0xff]
        %v530 = vld [vmem:[%s1 + $0xe0] sm:$0xff]
        %v531 = vld [vmem:[%s1 + $0xe8] sm:$0xff]
        %v532 = vld [vmem:[%s1 + $0xf0] sm:$0xff]
        %v533 = vld [vmem:[%s1 + $0xf8] sm:$0xff]
        %v534 = vld [vmem:[%s1 + $0x100] sm:$0xff]
        %v535 = vld [vmem:[%s1 + $0x108] sm:$0xff]
        %v536 = vld [vmem:[%s1 + $0x110] sm:$0xff]
        %v537 = vld [vmem:[%s1 + $0x118] sm:$0xff]
        %v539 = vsel %vm493, %v462, 0
        %541 = vmatprep.subr.mxu0 0.0
        %542 = vmatpush1.msra.mxu0 %v502
        %543 = vmatprep.subr.mxu0 0.0
        %544 = vmatpush1.msra.mxu0 %v503
        %545 = vmatprep.subr.mxu0 0.0
        %546 = vmatpush1.msra.mxu0 %v504
        %547 = vmatprep.subr.mxu0 0.0
        %548 = vmatpush1.msra.mxu0 %v505
        %549 = vmatprep.subr.mxu0 0.0
        %550 = vmatpush1.msra.mxu0 %v506
        %551 = vmatprep.subr.mxu0 0.0
        %552 = vmatpush1.msra.mxu0 %v507
        %553 = vmatprep.subr.mxu0 0.0
        %554 = vmatpush1.msra.mxu0 %v508
        %555 = vmatprep.subr.mxu0 0.0
        %556 = vmatpush1.msra.mxu0 %v509
        %557 = vmatprep.subr.mxu0 0.0
        %558 = vmatpush1.msra.mxu0 %v510
        %559 = vmatprep.subr.mxu0 0.0
        %560 = vmatpush1.msra.mxu0 %v511
        %561 = vmatprep.subr.mxu0 0.0
        %562 = vmatpush1.msra.mxu0 %v512
        %563 = vmatprep.subr.mxu0 0.0
        %564 = vmatpush1.msra.mxu0 %v513
        %565 = vmatprep.subr.mxu0 0.0
        %566 = vmatpush1.msra.mxu0 %v514
        %567 = vmatprep.subr.mxu0 0.0
        %568 = vmatpush1.msra.mxu0 %v515
        %569 = vmatprep.subr.mxu0 0.0
        %570 = vmatpush1.msra.mxu0 %v516
        %571 = vmatprep.subr.mxu0 0.0
        %572 = vmatpush1.msra.mxu0 %v517
        %573 = vmatprep.subr.mxu0 0.0
        %574 = vmatpush1.msra.mxu0 %v518
        %575 = vmatprep.subr.mxu0 0.0
        %576 = vmatpush1.msra.mxu0 %v519
        %577 = vmatprep.subr.mxu0 0.0
        %578 = vmatpush1.msra.mxu0 %v520
        %579 = vmatprep.subr.mxu0 0.0
        %580 = vmatpush1.msra.mxu0 %v521
        %581 = vmatprep.subr.mxu0 0.0
        %582 = vmatpush1.msra.mxu0 %v522
        %583 = vmatprep.subr.mxu0 0.0
        %584 = vmatpush1.msra.mxu0 %v523
        %585 = vmatprep.subr.mxu0 0.0
        %586 = vmatpush1.msra.mxu0 %v524
        %587 = vmatprep.subr.mxu0 0.0
        %588 = vmatpush1.msra.mxu0 %v525
        %589 = vmatprep.subr.mxu0 0.0
        %590 = vmatpush1.msra.mxu0 %v526
        %591 = vmatprep.subr.mxu0 0.0
        %592 = vmatpush1.msra.mxu0 %v527
        %593 = vmatprep.subr.mxu0 0.0
        %594 = vmatpush1.msra.mxu0 %v528
        %595 = vmatprep.subr.mxu0 0.0
        %596 = vmatpush1.msra.mxu0 %v529
        %597 = vmatprep.subr.mxu0 0.0
        %598 = vmatpush1.msra.mxu0 %v530
        %599 = vmatprep.subr.mxu0 0.0
        %600 = vmatpush1.msra.mxu0 %v531
        %601 = vmatprep.subr.mxu0 0.0
        %602 = vmatpush1.msra.mxu0 %v532
        %603 = vmatprep.subr.mxu0 0.0
        %604 = vmatpush1.msra.mxu0 %v533
        %605 = vmatprep.mubr.f32.mxu0 %v501
        %606 = vmatmul.mubr.f32.gmra.mrb[0].mxu0 %v498
        %v607 = vpop.f32.mrb[0].mxu0
        %v608 = vadd.f32 0.0, %v607
        %v609 = vpop.f32.mrb[0].mxu0
        %610 = vdwg.mxu0
        %611 = vmatprep.subr.mxu0 0.0
        %612 = vmatpush1.msra.mxu0 %v534
        %613 = vmatprep.subr.mxu0 0.0
        %614 = vmatpush1.msra.mxu0 %v535
        %615 = vmatprep.subr.mxu0 0.0
        %616 = vmatpush1.msra.mxu0 %v536
        %617 = vmatprep.subr.mxu0 0.0
        %618 = vmatpush1.msra.mxu0 %v537
        %619 = vmatprep.subr.mxu0 0.0
        %620 = vmatpush1.msra.mxu0 0.0
        %621 = vmatprep.subr.mxu0 0.0
        %622 = vmatpush1.msra.mxu0 0.0
        %623 = vmatprep.subr.mxu0 0.0
        %624 = vmatpush1.msra.mxu0 0.0
        %625 = vmatprep.subr.mxu0 0.0
        %626 = vmatpush1.msra.mxu0 0.0
        %627 = vmatprep.subr.mxu0 0.0
        %628 = vmatpush1.msra.mxu0 0.0
        %629 = vmatprep.subr.mxu0 0.0
        %630 = vmatpush1.msra.mxu0 0.0
        %631 = vmatprep.subr.mxu0 0.0
        %632 = vmatpush1.msra.mxu0 0.0
        %633 = vmatprep.subr.mxu0 0.0
        %634 = vmatpush1.msra.mxu0 0.0
        %635 = vmatprep.subr.mxu0 0.0
        %636 = vmatpush1.msra.mxu0 0.0
        %637 = vmatprep.subr.mxu0 0.0
        %638 = vmatpush1.msra.mxu0 0.0
        %639 = vmatprep.subr.mxu0 0.0
        %640 = vmatpush1.msra.mxu0 0.0
        %641 = vmatprep.subr.mxu0 0.0
        %642 = vmatpush1.msra.mxu0 0.0
        %643 = vmatprep.subr.mxu0 0.0
        %644 = vmatpush1.msra.mxu0 0.0
        %645 = vmatprep.subr.mxu0 0.0
        %646 = vmatpush1.msra.mxu0 0.0
        %647 = vmatprep.subr.mxu0 0.0
        %648 = vmatpush1.msra.mxu0 0.0
        %649 = vmatprep.subr.mxu0 0.0
        %650 = vmatpush1.msra.mxu0 0.0
        %651 = vmatprep.subr.mxu0 0.0
        %652 = vmatpush1.msra.mxu0 0.0
        %653 = vmatprep.subr.mxu0 0.0
        %654 = vmatpush1.msra.mxu0 0.0
        %655 = vmatprep.subr.mxu0 0.0
        %656 = vmatpush1.msra.mxu0 0.0
        %657 = vmatprep.subr.mxu0 0.0
        %658 = vmatpush1.msra.mxu0 0.0
        %659 = vmatprep.subr.mxu0 0.0
        %660 = vmatpush1.msra.mxu0 0.0
        %661 = vmatprep.subr.mxu0 0.0
        %662 = vmatpush1.msra.mxu0 0.0
        %663 = vmatprep.subr.mxu0 0.0
        %664 = vmatpush1.msra.mxu0 0.0
        %665 = vmatprep.subr.mxu0 0.0
        %666 = vmatpush1.msra.mxu0 0.0
        %667 = vmatprep.subr.mxu0 0.0
        %668 = vmatpush1.msra.mxu0 0.0
        %669 = vmatprep.subr.mxu0 0.0
        %670 = vmatpush1.msra.mxu0 0.0
        %671 = vmatprep.subr.mxu0 0.0
        %672 = vmatpush1.msra.mxu0 0.0
        %673 = vmatprep.subr.mxu0 0.0
        %674 = vmatpush1.msra.mxu0 0.0
        %675 = vmatprep.mubr.f32.mxu0 0.0
        %676 = vmatmul.mubr.f32.gmra.mrb[0].mxu0 %v539
        %v677 = vpop.f32.mrb[0].mxu0
        %v678 = vadd.f32 %v608, %v677
        %v679 = vpop.f32.mrb[0].mxu0
        %680 = vdwg.mxu0
        %v681 = vld [vmem:[%s2] sm:$0x1]
        %v683 = vlaneseq
        %v684 = vshrl.u32 %v683, 7
        %v685 = vsub.s32 0, %v684
        %v686 = vrot.slane %v681, %v685
        %v688 = vmul.f32 %v678, %v686
        %v689 = vld [vmem:[%s3] sm:$0x1]
        %v691 = vlaneseq
        %v692 = vshrl.u32 %v691, 7
        %v693 = vsub.s32 0, %v692
        %v694 = vrot.slane %v689, %v693
        %v696 = vadd.f32 %v688, %v694
        %vm697 = vcmp.ge.f32.partialorder %v696, -2.2
        %v698 = vsel %vm697, 1, 0
        %v699 = vcvt.s32.f32 %v698
        %vm700 = vcmp.ge.f32.partialorder %v696, -1.8
        %v701 = vsel %vm700, 1, 0
        %v702 = vcvt.s32.f32 %v701
        %vm703 = vcmp.ge.f32.partialorder %v696, -1.4
        %v704 = vsel %vm703, 1, 0
        %v705 = vcvt.s32.f32 %v704
        %vm706 = vcmp.ge.f32.partialorder %v696, -1.0
        %v707 = vsel %vm706, 1, 0
        %v708 = vcvt.s32.f32 %v707
        %vm709 = vcmp.ge.f32.partialorder %v696, -0.6
        %v710 = vsel %vm709, 1, 0
        %v711 = vcvt.s32.f32 %v710
        %vm712 = vcmp.ge.f32.partialorder %v696, -0.19999999
        %v713 = vsel %vm712, 1, 0
        %v714 = vcvt.s32.f32 %v713
        %vm715 = vcmp.ge.f32.partialorder %v696, 0.20000005
        %v716 = vsel %vm715, 1, 0
        %v717 = vcvt.s32.f32 %v716
        %vm718 = vcmp.ge.f32.partialorder %v696, 0.6
        %v719 = vsel %vm718, 1, 0
        %v720 = vcvt.s32.f32 %v719
        %vm721 = vcmp.ge.f32.partialorder %v696, 1.0
        %v722 = vsel %vm721, 1, 0
        %v723 = vcvt.s32.f32 %v722
        %vm724 = vcmp.ge.f32.partialorder %v696, 1.4000001
        %v725 = vsel %vm724, 1, 0
        %v726 = vcvt.s32.f32 %v725
        %vm727 = vcmp.ge.f32.partialorder %v696, 1.8
        %v728 = vsel %vm727, 1, 0
        %v729 = vcvt.s32.f32 %v728
        %vm730 = vcmp.ge.f32.partialorder %v696, 2.2
        %v731 = vsel %vm730, 1, 0
        %v732 = vcvt.s32.f32 %v731
        %v733 = vsub.f32 %v699, %v702
        %v734 = vsub.f32 %v702, %v705
        %v735 = vsub.f32 %v705, %v708
        %v736 = vsub.f32 %v708, %v711
        %v737 = vsub.f32 %v711, %v714
        %v738 = vsub.f32 %v714, %v717
        %v739 = vsub.f32 %v717, %v720
        %v740 = vsub.f32 %v720, %v723
        %v741 = vsub.f32 %v723, %v726
        %v742 = vsub.f32 %v726, %v729
        %v743 = vsub.f32 %v729, %v732
        %v744 = vmul.f32 %v696, 2.5
        %v745 = vsub.f32 %v744, -5.5
        %v746 = vsub.f32 %v744, -4.5
        %v747 = vsub.f32 %v744, -3.5
        %v748 = vsub.f32 %v744, -2.5
        %v749 = vsub.f32 %v744, -1.5
        %v750 = vsub.f32 %v744, -0.49999997
        %v751 = vsub.f32 %v744, 0.5000001
        %v752 = vsub.f32 %v744, 1.5
        %v753 = vsub.f32 %v744, 2.5
        %v754 = vsub.f32 %v744, 3.5000002
        %v755 = vsub.f32 %v744, 4.5
        %v756 = vsub.f32 1.0, %v746
        %v757 = vsub.f32 1.0, %v747
        %v758 = vsub.f32 1.0, %v748
        %v759 = vsub.f32 1.0, %v749
        %v760 = vsub.f32 1.0, %v750
        %v761 = vsub.f32 1.0, %v751
        %v762 = vsub.f32 1.0, %v752
        %v763 = vsub.f32 1.0, %v753
        %v764 = vsub.f32 1.0, %v754
        %v765 = vsub.f32 1.0, %v755
        %v766 = vmul.f32 %v745, %v733
        %v767 = vmul.f32 %v756, %v734
        %v768 = vadd.f32 %v766, %v767
        %v769 = vmul.f32 %v746, %v734
        %v770 = vmul.f32 %v757, %v735
        %v771 = vadd.f32 %v769, %v770
        %v772 = vmul.f32 %v747, %v735
        %v773 = vmul.f32 %v758, %v736
        %v774 = vadd.f32 %v772, %v773
        %v775 = vmul.f32 %v748, %v736
        %v776 = vmul.f32 %v759, %v737
        %v777 = vadd.f32 %v775, %v776
        %v778 = vmul.f32 %v749, %v737
        %v779 = vmul.f32 %v760, %v738
        %v780 = vadd.f32 %v778, %v779
        %v781 = vmul.f32 %v750, %v738
        %v782 = vmul.f32 %v761, %v739
        %v783 = vadd.f32 %v781, %v782
        %v784 = vmul.f32 %v751, %v739
        %v785 = vmul.f32 %v762, %v740
        %v786 = vadd.f32 %v784, %v785
        %v787 = vmul.f32 %v752, %v740
        %v788 = vmul.f32 %v763, %v741
        %v789 = vadd.f32 %v787, %v788
        %v790 = vmul.f32 %v753, %v741
        %v791 = vmul.f32 %v764, %v742
        %v792 = vadd.f32 %v790, %v791
        %v793 = vmul.f32 %v754, %v742
        %v794 = vmul.f32 %v765, %v743
        %v795 = vadd.f32 %v793, %v794
        %v796 = vmul.f32 %v696, 1.25
        %v797 = vsub.f32 %v796, -2.75
        %v798 = vsub.f32 %v796, -2.25
        %v799 = vsub.f32 %v796, -1.75
        %v800 = vsub.f32 %v796, -1.25
        %v801 = vsub.f32 %v796, -0.75
        %v802 = vsub.f32 %v796, -0.24999999
        %v803 = vsub.f32 %v796, 0.25000006
        %v804 = vsub.f32 %v796, 0.75
        %v805 = vsub.f32 %v796, 1.25
        %v806 = vsub.f32 %v796, 1.7500001
        %v807 = vsub.f32 1.0, %v798
        %v808 = vsub.f32 1.0, %v799
        %v809 = vsub.f32 1.0, %v800
        %v810 = vsub.f32 1.0, %v801
        %v811 = vsub.f32 1.0, %v802
        %v812 = vsub.f32 1.0, %v803
        %v813 = vsub.f32 1.0, %v804
        %v814 = vsub.f32 1.0, %v805
        %v815 = vsub.f32 1.0, %v806
        %v816 = vmul.f32 %v797, %v768
        %v817 = vmul.f32 %v807, %v771
        %v818 = vadd.f32 %v816, %v817
        %v819 = vmul.f32 %v798, %v771
        %v820 = vmul.f32 %v808, %v774
        %v821 = vadd.f32 %v819, %v820
        %v822 = vmul.f32 %v799, %v774
        %v823 = vmul.f32 %v809, %v777
        %v824 = vadd.f32 %v822, %v823
        %v825 = vmul.f32 %v800, %v777
        %v826 = vmul.f32 %v810, %v780
        %v827 = vadd.f32 %v825, %v826
        %v828 = vmul.f32 %v801, %v780
        %v829 = vmul.f32 %v811, %v783
        %v830 = vadd.f32 %v828, %v829
        %v831 = vmul.f32 %v802, %v783
        %v832 = vmul.f32 %v812, %v786
        %v833 = vadd.f32 %v831, %v832
        %v834 = vmul.f32 %v803, %v786
        %v835 = vmul.f32 %v813, %v789
        %v836 = vadd.f32 %v834, %v835
        %v837 = vmul.f32 %v804, %v789
        %v838 = vmul.f32 %v814, %v792
        %v839 = vadd.f32 %v837, %v838
        %v840 = vmul.f32 %v805, %v792
        %v841 = vmul.f32 %v815, %v795
        %v842 = vadd.f32 %v840, %v841
        %v843 = vmul.f32 %v696, 0.8333333
        %v844 = vsub.f32 %v843, -1.8333334
        %v845 = vsub.f32 %v843, -1.5
        %v846 = vsub.f32 %v843, -1.1666666
        %v847 = vsub.f32 %v843, -0.8333333
        %v848 = vsub.f32 %v843, -0.5
        %v849 = vsub.f32 %v843, -0.16666666
        %v850 = vsub.f32 %v843, 0.1666667
        %v851 = vsub.f32 %v843, 0.5
        %v852 = vsub.f32 %v843, 0.8333333
        %v853 = vsub.f32 1.0, %v845
        %v854 = vsub.f32 1.0, %v846
        %v855 = vsub.f32 1.0, %v847
        %v856 = vsub.f32 1.0, %v848
        %v857 = vsub.f32 1.0, %v849
        %v858 = vsub.f32 1.0, %v850
        %v859 = vsub.f32 1.0, %v851
        %v860 = vsub.f32 1.0, %v852
        %v861 = vmul.f32 %v844, %v818
        %v862 = vmul.f32 %v853, %v821
        %v863 = vadd.f32 %v861, %v862
        %v864 = vmul.f32 %v845, %v821
        %v865 = vmul.f32 %v854, %v824
        %v866 = vadd.f32 %v864, %v865
        %v867 = vmul.f32 %v846, %v824
        %v868 = vmul.f32 %v855, %v827
        %v869 = vadd.f32 %v867, %v868
        %v870 = vmul.f32 %v847, %v827
        %v871 = vmul.f32 %v856, %v830
        %v872 = vadd.f32 %v870, %v871
        %v873 = vmul.f32 %v848, %v830
        %v874 = vmul.f32 %v857, %v833
        %v875 = vadd.f32 %v873, %v874
        %v876 = vmul.f32 %v849, %v833
        %v877 = vmul.f32 %v858, %v836
        %v878 = vadd.f32 %v876, %v877
        %v879 = vmul.f32 %v850, %v836
        %v880 = vmul.f32 %v859, %v839
        %v881 = vadd.f32 %v879, %v880
        %v882 = vmul.f32 %v851, %v839
        %v883 = vmul.f32 %v860, %v842
        %v884 = vadd.f32 %v882, %v883
        %v885 = vsub.f32 0.0, %v696
        %v886 = vmul.f32 %v885, 1.442695
        %v887 = vpow.pop %v886
        %v888 = vadd.f32 %v887, 1.0
        %v889 = vrcp.pop %v888
        %v890 = vmul.f32 %v696, %v889
        %892 = vrot.lane.b32.xlu0 %v863, 64
        %v893 = vpop.permute.xlu0 %892
        %896 = vrot.lane.b32.xlu0 %v869, 64
        %v897 = vpop.permute.xlu0 %896
        %900 = vrot.lane.b32.xlu0 %v875, 64
        %v901 = vpop.permute.xlu0 %900
        %904 = vrot.lane.b32.xlu0 %v881, 64
        %v905 = vpop.permute.xlu0 %904
        %v907 = vsel %vm495, %v890, %v893
        %v908 = vsel %vm495, %v866, %v897
        %v909 = vsel %vm495, %v872, %v901
        %v910 = vsel %vm495, %v878, %v905
        %v911 = vld [vmem:[%s4] sm:$0xff]
        %v912 = vld [vmem:[%s4 + $0x8] sm:$0xff]
        %v913 = vld [vmem:[%s4 + $0x10] sm:$0xff]
        %v914 = vld [vmem:[%s4 + $0x18] sm:$0xff]
        %v915 = vld [vmem:[%s4 + $0x20] sm:$0xff]
        %v916 = vld [vmem:[%s4 + $0x28] sm:$0xff]
        %v917 = vld [vmem:[%s4 + $0x30] sm:$0xff]
        %v918 = vld [vmem:[%s4 + $0x38] sm:$0xff]
        %v919 = vld [vmem:[%s4 + $0x40] sm:$0xff]
        %v920 = vld [vmem:[%s4 + $0x48] sm:$0xff]
        %v921 = vld [vmem:[%s4 + $0x50] sm:$0xff]
        %v922 = vld [vmem:[%s4 + $0x58] sm:$0xff]
        %v923 = vld [vmem:[%s4 + $0x60] sm:$0xff]
        %v924 = vld [vmem:[%s4 + $0x68] sm:$0xff]
        %v925 = vld [vmem:[%s4 + $0x70] sm:$0xff]
        %v926 = vld [vmem:[%s4 + $0x78] sm:$0xff]
        %v927 = vld [vmem:[%s4 + $0x80] sm:$0xff]
        %v928 = vld [vmem:[%s4 + $0x88] sm:$0xff]
        %v929 = vld [vmem:[%s4 + $0x90] sm:$0xff]
        %v930 = vld [vmem:[%s4 + $0x98] sm:$0xff]
        %v931 = vld [vmem:[%s4 + $0xa0] sm:$0xff]
        %v932 = vld [vmem:[%s4 + $0xa8] sm:$0xff]
        %v933 = vld [vmem:[%s4 + $0xb0] sm:$0xff]
        %v934 = vld [vmem:[%s4 + $0xb8] sm:$0xff]
        %v935 = vld [vmem:[%s4 + $0xc0] sm:$0xff]
        %v936 = vld [vmem:[%s4 + $0xc8] sm:$0xff]
        %v937 = vld [vmem:[%s4 + $0xd0] sm:$0xff]
        %v938 = vld [vmem:[%s4 + $0xd8] sm:$0xff]
        %v939 = vld [vmem:[%s4 + $0xe0] sm:$0xff]
        %v940 = vld [vmem:[%s4 + $0xe8] sm:$0xff]
        %v941 = vld [vmem:[%s4 + $0xf0] sm:$0xff]
        %v942 = vld [vmem:[%s4 + $0xf8] sm:$0xff]
        %v943 = vld [vmem:[%s4 + $0x100] sm:$0xff]
        %v944 = vld [vmem:[%s4 + $0x108] sm:$0xff]
        %v945 = vld [vmem:[%s4 + $0x110] sm:$0xff]
        %v946 = vld [vmem:[%s4 + $0x118] sm:$0xff]
        %v947 = vld [vmem:[%s4 + $0x120] sm:$0xff]
        %v948 = vld [vmem:[%s4 + $0x128] sm:$0xff]
        %v949 = vld [vmem:[%s4 + $0x130] sm:$0xff]
        %v950 = vld [vmem:[%s4 + $0x138] sm:$0xff]
        %v951 = vld [vmem:[%s4 + $0x140] sm:$0xff]
        %v952 = vld [vmem:[%s4 + $0x148] sm:$0xff]
        %v953 = vld [vmem:[%s4 + $0x150] sm:$0xff]
        %v954 = vld [vmem:[%s4 + $0x158] sm:$0xff]
        %v955 = vld [vmem:[%s4 + $0x160] sm:$0xff]
        %v956 = vld [vmem:[%s4 + $0x168] sm:$0xff]
        %v957 = vld [vmem:[%s4 + $0x170] sm:$0xff]
        %v958 = vld [vmem:[%s4 + $0x178] sm:$0xff]
        %v959 = vld [vmem:[%s4 + $0x180] sm:$0xff]
        %v960 = vld [vmem:[%s4 + $0x188] sm:$0xff]
        %v961 = vld [vmem:[%s4 + $0x190] sm:$0xff]
        %v962 = vld [vmem:[%s4 + $0x198] sm:$0xff]
        %v963 = vld [vmem:[%s4 + $0x1a0] sm:$0xff]
        %v964 = vld [vmem:[%s4 + $0x1a8] sm:$0xff]
        %v965 = vld [vmem:[%s4 + $0x1b0] sm:$0xff]
        %v966 = vld [vmem:[%s4 + $0x1b8] sm:$0xff]
        %v967 = vld [vmem:[%s4 + $0x1c0] sm:$0xff]
        %v968 = vld [vmem:[%s4 + $0x1c8] sm:$0xff]
        %v969 = vld [vmem:[%s4 + $0x1d0] sm:$0xff]
        %v970 = vld [vmem:[%s4 + $0x1d8] sm:$0xff]
        %v971 = vld [vmem:[%s4 + $0x1e0] sm:$0xff]
        %v972 = vld [vmem:[%s4 + $0x1e8] sm:$0xff]
        %v973 = vld [vmem:[%s4 + $0x1f0] sm:$0xff]
        %v974 = vld [vmem:[%s4 + $0x1f8] sm:$0xff]
        %v975 = vld [vmem:[%s4 + $0x200] sm:$0xff]
        %v976 = vld [vmem:[%s4 + $0x208] sm:$0xff]
        %v977 = vld [vmem:[%s4 + $0x210] sm:$0xff]
        %v978 = vld [vmem:[%s4 + $0x218] sm:$0xff]
        %v979 = vld [vmem:[%s4 + $0x220] sm:$0xff]
        %v980 = vld [vmem:[%s4 + $0x228] sm:$0xff]
        %v981 = vld [vmem:[%s4 + $0x230] sm:$0xff]
        %v982 = vld [vmem:[%s4 + $0x238] sm:$0xff]
        %v984 = vsel %vm495, %v884, 0
        %986 = vmatprep.subr.mxu0 0.0
        %987 = vmatpush1.msra.mxu0 %v911
        %988 = vmatprep.subr.mxu0 0.0
        %989 = vmatpush1.msra.mxu0 %v912
        %990 = vmatprep.subr.mxu0 0.0
        %991 = vmatpush1.msra.mxu0 %v913
        %992 = vmatprep.subr.mxu0 0.0
        %993 = vmatpush1.msra.mxu0 %v914
        %994 = vmatprep.subr.mxu0 0.0
        %995 = vmatpush1.msra.mxu0 %v915
        %996 = vmatprep.subr.mxu0 0.0
        %997 = vmatpush1.msra.mxu0 %v916
        %998 = vmatprep.subr.mxu0 0.0
        %999 = vmatpush1.msra.mxu0 %v917
        %1000 = vmatprep.subr.mxu0 0.0
        %1001 = vmatpush1.msra.mxu0 %v918
        %1002 = vmatprep.subr.mxu0 0.0
        %1003 = vmatpush1.msra.mxu0 %v919
        %1004 = vmatprep.subr.mxu0 0.0
        %1005 = vmatpush1.msra.mxu0 %v920
        %1006 = vmatprep.subr.mxu0 0.0
        %1007 = vmatpush1.msra.mxu0 %v921
        %1008 = vmatprep.subr.mxu0 0.0
        %1009 = vmatpush1.msra.mxu0 %v922
        %1010 = vmatprep.subr.mxu0 0.0
        %1011 = vmatpush1.msra.mxu0 %v923
        %1012 = vmatprep.subr.mxu0 0.0
        %1013 = vmatpush1.msra.mxu0 %v924
        %1014 = vmatprep.subr.mxu0 0.0
        %1015 = vmatpush1.msra.mxu0 %v925
        %1016 = vmatprep.subr.mxu0 0.0
        %1017 = vmatpush1.msra.mxu0 %v926
        %1018 = vmatprep.subr.mxu0 0.0
        %1019 = vmatpush1.msra.mxu0 %v927
        %1020 = vmatprep.subr.mxu0 0.0
        %1021 = vmatpush1.msra.mxu0 %v928
        %1022 = vmatprep.subr.mxu0 0.0
        %1023 = vmatpush1.msra.mxu0 %v929
        %1024 = vmatprep.subr.mxu0 0.0
        %1025 = vmatpush1.msra.mxu0 %v930
        %1026 = vmatprep.subr.mxu0 0.0
        %1027 = vmatpush1.msra.mxu0 %v931
        %1028 = vmatprep.subr.mxu0 0.0
        %1029 = vmatpush1.msra.mxu0 %v932
        %1030 = vmatprep.subr.mxu0 0.0
        %1031 = vmatpush1.msra.mxu0 %v933
        %1032 = vmatprep.subr.mxu0 0.0
        %1033 = vmatpush1.msra.mxu0 %v934
        %1034 = vmatprep.subr.mxu0 0.0
        %1035 = vmatpush1.msra.mxu0 %v935
        %1036 = vmatprep.subr.mxu0 0.0
        %1037 = vmatpush1.msra.mxu0 %v936
        %1038 = vmatprep.subr.mxu0 0.0
        %1039 = vmatpush1.msra.mxu0 %v937
        %1040 = vmatprep.subr.mxu0 0.0
        %1041 = vmatpush1.msra.mxu0 %v938
        %1042 = vmatprep.subr.mxu0 0.0
        %1043 = vmatpush1.msra.mxu0 %v939
        %1044 = vmatprep.subr.mxu0 0.0
        %1045 = vmatpush1.msra.mxu0 %v940
        %1046 = vmatprep.subr.mxu0 0.0
        %1047 = vmatpush1.msra.mxu0 %v941
        %1048 = vmatprep.subr.mxu0 0.0
        %1049 = vmatpush1.msra.mxu0 %v942
        %1050 = vmatprep.mubr.f32.mxu0 %v908
        %1051 = vmatmul.mubr.f32.gmra.mrb[0].mxu0 %v907
        %v1052 = vpop.f32.mrb[0].mxu0
        %v1053 = vadd.f32 0.0, %v1052
        %v1054 = vpop.f32.mrb[0].mxu0
        %1055 = vdwg.mxu0
        %1056 = vmatprep.subr.mxu0 0.0
        %1057 = vmatpush1.msra.mxu0 %v943
        %1058 = vmatprep.subr.mxu0 0.0
        %1059 = vmatpush1.msra.mxu0 %v944
        %1060 = vmatprep.subr.mxu0 0.0
        %1061 = vmatpush1.msra.mxu0 %v945
        %1062 = vmatprep.subr.mxu0 0.0
        %1063 = vmatpush1.msra.mxu0 %v946
        %1064 = vmatprep.subr.mxu0 0.0
        %1065 = vmatpush1.msra.mxu0 %v947
        %1066 = vmatprep.subr.mxu0 0.0
        %1067 = vmatpush1.msra.mxu0 %v948
        %1068 = vmatprep.subr.mxu0 0.0
        %1069 = vmatpush1.msra.mxu0 %v949
        %1070 = vmatprep.subr.mxu0 0.0
        %1071 = vmatpush1.msra.mxu0 %v950
        %1072 = vmatprep.subr.mxu0 0.0
        %1073 = vmatpush1.msra.mxu0 %v951
        %1074 = vmatprep.subr.mxu0 0.0
        %1075 = vmatpush1.msra.mxu0 %v952
        %1076 = vmatprep.subr.mxu0 0.0
        %1077 = vmatpush1.msra.mxu0 %v953
        %1078 = vmatprep.subr.mxu0 0.0
        %1079 = vmatpush1.msra.mxu0 %v954
        %1080 = vmatprep.subr.mxu0 0.0
        %1081 = vmatpush1.msra.mxu0 %v955
        %1082 = vmatprep.subr.mxu0 0.0
        %1083 = vmatpush1.msra.mxu0 %v956
        %1084 = vmatprep.subr.mxu0 0.0
        %1085 = vmatpush1.msra.mxu0 %v957
        %1086 = vmatprep.subr.mxu0 0.0
        %1087 = vmatpush1.msra.mxu0 %v958
        %1088 = vmatprep.subr.mxu0 0.0
        %1089 = vmatpush1.msra.mxu0 %v959
        %1090 = vmatprep.subr.mxu0 0.0
        %1091 = vmatpush1.msra.mxu0 %v960
        %1092 = vmatprep.subr.mxu0 0.0
        %1093 = vmatpush1.msra.mxu0 %v961
        %1094 = vmatprep.subr.mxu0 0.0
        %1095 = vmatpush1.msra.mxu0 %v962
        %1096 = vmatprep.subr.mxu0 0.0
        %1097 = vmatpush1.msra.mxu0 %v963
        %1098 = vmatprep.subr.mxu0 0.0
        %1099 = vmatpush1.msra.mxu0 %v964
        %1100 = vmatprep.subr.mxu0 0.0
        %1101 = vmatpush1.msra.mxu0 %v965
        %1102 = vmatprep.subr.mxu0 0.0
        %1103 = vmatpush1.msra.mxu0 %v966
        %1104 = vmatprep.subr.mxu0 0.0
        %1105 = vmatpush1.msra.mxu0 %v967
        %1106 = vmatprep.subr.mxu0 0.0
        %1107 = vmatpush1.msra.mxu0 %v968
        %1108 = vmatprep.subr.mxu0 0.0
        %1109 = vmatpush1.msra.mxu0 %v969
        %1110 = vmatprep.subr.mxu0 0.0
        %1111 = vmatpush1.msra.mxu0 %v970
        %1112 = vmatprep.subr.mxu0 0.0
        %1113 = vmatpush1.msra.mxu0 %v971
        %1114 = vmatprep.subr.mxu0 0.0
        %1115 = vmatpush1.msra.mxu0 %v972
        %1116 = vmatprep.subr.mxu0 0.0
        %1117 = vmatpush1.msra.mxu0 %v973
        %1118 = vmatprep.subr.mxu0 0.0
        %1119 = vmatpush1.msra.mxu0 %v974
        %1120 = vmatprep.mubr.f32.mxu0 %v910
        %1121 = vmatmul.mubr.f32.gmra.mrb[0].mxu0 %v909
        %v1122 = vpop.f32.mrb[0].mxu0
        %v1123 = vadd.f32 %v1053, %v1122
        %v1124 = vpop.f32.mrb[0].mxu0
        %1125 = vdwg.mxu0
        %1126 = vmatprep.subr.mxu0 0.0
        %1127 = vmatpush1.msra.mxu0 %v975
        %1128 = vmatprep.subr.mxu0 0.0
        %1129 = vmatpush1.msra.mxu0 %v976
        %1130 = vmatprep.subr.mxu0 0.0
        %1131 = vmatpush1.msra.mxu0 %v977
        %1132 = vmatprep.subr.mxu0 0.0
        %1133 = vmatpush1.msra.mxu0 %v978
        %1134 = vmatprep.subr.mxu0 0.0
        %1135 = vmatpush1.msra.mxu0 %v979
        %1136 = vmatprep.subr.mxu0 0.0
        %1137 = vmatpush1.msra.mxu0 %v980
        %1138 = vmatprep.subr.mxu0 0.0
        %1139 = vmatpush1.msra.mxu0 %v981
        %1140 = vmatprep.subr.mxu0 0.0
        %1141 = vmatpush1.msra.mxu0 %v982
        %1142 = vmatprep.subr.mxu0 0.0
        %1143 = vmatpush1.msra.mxu0 0.0
        %1144 = vmatprep.subr.mxu0 0.0
        %1145 = vmatpush1.msra.mxu0 0.0
        %1146 = vmatprep.subr.mxu0 0.0
        %1147 = vmatpush1.msra.mxu0 0.0
        %1148 = vmatprep.subr.mxu0 0.0
        %1149 = vmatpush1.msra.mxu0 0.0
        %1150 = vmatprep.subr.mxu0 0.0
        %1151 = vmatpush1.msra.mxu0 0.0
        %1152 = vmatprep.subr.mxu0 0.0
        %1153 = vmatpush1.msra.mxu0 0.0
        %1154 = vmatprep.subr.mxu0 0.0
        %1155 = vmatpush1.msra.mxu0 0.0
        %1156 = vmatprep.subr.mxu0 0.0
        %1157 = vmatpush1.msra.mxu0 0.0
        %1158 = vmatprep.subr.mxu0 0.0
        %1159 = vmatpush1.msra.mxu0 0.0
        %1160 = vmatprep.subr.mxu0 0.0
        %1161 = vmatpush1.msra.mxu0 0.0
        %1162 = vmatprep.subr.mxu0 0.0
        %1163 = vmatpush1.msra.mxu0 0.0
        %1164 = vmatprep.subr.mxu0 0.0
        %1165 = vmatpush1.msra.mxu0 0.0
        %1166 = vmatprep.subr.mxu0 0.0
        %1167 = vmatpush1.msra.mxu0 0.0
        %1168 = vmatprep.subr.mxu0 0.0
        %1169 = vmatpush1.msra.mxu0 0.0
        %1170 = vmatprep.subr.mxu0 0.0
        %1171 = vmatpush1.msra.mxu0 0.0
        %1172 = vmatprep.subr.mxu0 0.0
        %1173 = vmatpush1.msra.mxu0 0.0
        %1174 = vmatprep.subr.mxu0 0.0
        %1175 = vmatpush1.msra.mxu0 0.0
        %1176 = vmatprep.subr.mxu0 0.0
        %1177 = vmatpush1.msra.mxu0 0.0
        %1178 = vmatprep.subr.mxu0 0.0
        %1179 = vmatpush1.msra.mxu0 0.0
        %1180 = vmatprep.subr.mxu0 0.0
        %1181 = vmatpush1.msra.mxu0 0.0
        %1182 = vmatprep.subr.mxu0 0.0
        %1183 = vmatpush1.msra.mxu0 0.0
        %1184 = vmatprep.subr.mxu0 0.0
        %1185 = vmatpush1.msra.mxu0 0.0
        %1186 = vmatprep.subr.mxu0 0.0
        %1187 = vmatpush1.msra.mxu0 0.0
        %1188 = vmatprep.subr.mxu0 0.0
        %1189 = vmatpush1.msra.mxu0 0.0
        %1190 = vmatprep.mubr.f32.mxu0 0.0
        %1191 = vmatmul.mubr.f32.gmra.mrb[0].mxu0 %v984
        %v1192 = vpop.f32.mrb[0].mxu0
        %v1193 = vadd.f32 %v1123, %v1192
        %v1194 = vpop.f32.mrb[0].mxu0
        %1195 = vdwg.mxu0
        %v1196 = vld [vmem:[%s5] sm:$0x1]
        %v1198 = vlaneseq
        %v1199 = vshrl.u32 %v1198, 7
        %v1200 = vsub.s32 0, %v1199
        %v1201 = vrot.slane %v1196, %v1200
        %v1203 = vmul.f32 %v1193, %v1201
        %v1204 = vld [vmem:[%s6] sm:$0x1]
        %v1206 = vlaneseq
        %v1207 = vshrl.u32 %v1206, 7
        %v1208 = vsub.s32 0, %v1207
        %v1209 = vrot.slane %v1204, %v1208
        %v1211 = vadd.f32 %v1203, %v1209
        %vm1212 = vcmask 130048
        %1213 = vst.msk [vmem:[%s269] sm:$0xff] %vm1212, %v1211
        %s1214 = sand.u32 %s181, 1
        %s1215 = scalar_lea.sflag [#allocation3], %s1214
        %s1216 = sand.u32 %s181, 1
        %s1217 = smul.addr %s1216, 8
        %s1218 = scalar_lea.vmem [#allocation2], %s1217
        // Predicated region
        $region49: #{tpu_custom_call.1} parent=47 // pred_check
          %p1219 = pneg %p191
        $region50: #{tpu_custom_call.1} parent=47 // pred_check_branch
          %1221 = sbr.rel (%p1219) target = $region52
        $region51: #{tpu_custom_call.1} parent=47 // pred_region
          %s1223 = ssub.s32 128, 128
          %1224 = vsyncadd %s1215, %s1223
          %s1225 = smul.addr %s21, 128
          %s1226 = scalar_lea.hbm %s7, %s1225
          %s1228 = sshll.u32 %s1218, 4
          %s1229 = int_to_ptr.vmem [resolvable:$true] %s1228
          %1231 = dma.vmem_to_hbm [thread:$0]  %s1229, 128, %s1226, %s1215
        $region52: #{tpu_custom_call.1} parent=47 // pred_fallthru
          _
      $region48: #{tpu_custom_call.1} parent=5 // pred_fallthru
        _
      %p1232 = scmp.le.s32.totalorder 2, %s16
      // Predicated region
      $region53: #{tpu_custom_call.1} parent=5 // pred_check
        %p1233 = pneg %p1232
      $region54: #{tpu_custom_call.1} parent=5 // pred_check_branch
        %1235 = sbr.rel (%p1233) target = $region56
      $region55: #{tpu_custom_call.1} parent=5 // pred_region
        %s1236 = ssub.s32 %s16, 2
        // Predicated region
        $region57: #{tpu_custom_call.1} parent=55 // pred_check
          %p1237 = pneg %p197
        $region58: #{tpu_custom_call.1} parent=55 // pred_check_branch
          %1239 = sbr.rel (%p1237) target = $region60
        $region59: #{tpu_custom_call.1} parent=55 // pred_region
          %s1240 = sand.u32 %s182, 1
          %s1241 = scalar_lea.sflag [#allocation3], %s1240
          %s1242 = sand.u32 %s182, 1
          %s1243 = smul.addr %s1242, 8
          %s1244 = scalar_lea.vmem [#allocation2], %s1243
          %1245 = dma.done %s1241, 128
        $region60: #{tpu_custom_call.1} parent=55 // pred_fallthru
          _
      $region56: #{tpu_custom_call.1} parent=5 // pred_fallthru
        _
    $region6: #{tpu_custom_call.1} parent=1 // loop_footer
      %s20 = sadd.s32 1, %s16
    $region7: #{tpu_custom_call.1} parent=1 // loop_footer_branch
      %15 = sbr.rel target = $region3
    $region8: #{tpu_custom_call.1} parent=1 // loop_exit
      _
    %1246 = vsyncpa [#allocation3], 1
    %s1247 = scalar_lea.sflag [#allocation3], 1
    %1248 = vsyncpa %s1247, 1

</llo_original>
